<compile_context>
chip_gen: v7x
topology: tpu7x:2x2x1
jax: 0.10.0
libtpu: 0.0.40
codegen_flags: <defaults>
</compile_context>

<pallas_src>
import functools

import numpy as np
import jax
import jax.numpy as jnp
from jax.experimental import pallas as pl
from jax.experimental.pallas import tpu as pltpu


# ----------------------------------------------------------------------------
# Small helpers
# ----------------------------------------------------------------------------
def _largest_divisor_leq(n, cap):
    cap = max(1, min(int(cap), int(n)))
    for d in range(cap, 0, -1):
        if n % d == 0:
            return d
    return 1


def bilinear_matrix(out_size, in_size):
    """PyTorch F.interpolate(mode='bilinear', align_corners=False) as a matrix."""
    if in_size == out_size:
        return jnp.eye(out_size, dtype=jnp.float32)
    scale = in_size / out_size
    i = np.arange(out_size)
    src = (i + 0.5) * scale - 0.5
    src = np.clip(src, 0.0, None)
    i0 = np.minimum(np.floor(src).astype(np.int64), in_size - 1)
    i1 = np.minimum(i0 + 1, in_size - 1)
    l1 = (src - i0).astype(np.float32)
    l0 = 1.0 - l1
    W = np.zeros((out_size, in_size), np.float32)
    W[i, i0] += l0
    W[i, i1] += l1
    return jnp.asarray(W)


# ----------------------------------------------------------------------------
# Stage A: per-branch folded projection + W-axis upsample (native H resolution)
# ----------------------------------------------------------------------------
def _proj_up_kernel(x_ref, w_ref, ww_ref, o_ref, *, bh):
    # x_ref: (1, bh, w, Cin); w_ref: (Cin, E); ww_ref: (W1, w); o_ref: (1, bh, W1, E)
    w_eff = w_ref[...]
    ww = ww_ref[...]
    for rr in range(bh):                                   # static unroll
        xr = x_ref[0, rr]                                  # (w, Cin)
        proj = jnp.dot(xr, w_eff, preferred_element_type=jnp.float32)   # (w, E)
        up = jnp.dot(ww, proj, preferred_element_type=jnp.float32)      # (W1, E)
        o_ref[0, rr] = up.astype(o_ref.dtype)


def branch_project_upsample(x, w_eff, ww):
    """x: (n, h, w, Cin) -> (n, h, W1, E): folded projection + W-upsample."""
    n, h, w, cin = x.shape
    W1 = ww.shape[0]
    E = w_eff.shape[1]
    bh = h if h <= 8 else 8
    assert h % bh == 0
    return pl.pallas_call(
        functools.partial(_proj_up_kernel, bh=bh),
        out_shape=jax.ShapeDtypeStruct((n, h, W1, E), w_eff.dtype),
        grid=(n, h // bh),
        in_specs=[pl.BlockSpec((1, bh, w, cin), lambda b, r: (b, r, 0, 0)),
                  pl.BlockSpec((cin, E), lambda b, r: (0, 0)),
                  pl.BlockSpec((W1, w), lambda b, r: (0, 0))],
        out_specs=pl.BlockSpec((1, bh, W1, E), lambda b, r: (b, r, 0, 0)),
        compiler_params=pltpu.CompilerParams(
            dimension_semantics=("parallel", "parallel")),
    )(x, w_eff, ww)


# ----------------------------------------------------------------------------
# Main fused kernel: c1 projection + H-upsample of resident branches + bias +
# ReLU + linear_pred, all per output row tile.  No full-res intermediates.
# ----------------------------------------------------------------------------
def _fuse_kernel(x1_ref, z2_ref, z3_ref, z4_ref, w1_ref, bias_ref, wp_ref, bp_ref,
                 pred_ref, logit_ref, *, th, W1, H1, h_sizes):
    j = pl.program_id(1)
    w1 = w1_ref[...]                                  # (C1, E)
    bias = bias_ref[...].astype(jnp.float32)          # (1, E)  folded BN + MLP biases
    wp = wp_ref[...]                                  # (E, K)
    bp = bp_ref[...].astype(jnp.float32)              # (1, K)
    z_refs = (z2_ref, z3_ref, z4_ref)

    for u in range(th):                               # static unroll over tile's H rows
        # Folded c1 MLP projection (c1 already at target resolution).
        acc = jnp.dot(x1_ref[0, u], w1, preferred_element_type=jnp.float32)  # (W1, E)
        H = j * th + u                                # output H row (runtime scalar)
        for z_ref, h_in in zip(z_refs, h_sizes):
            # PyTorch bilinear source row/weight, integer math:
            #   src = (H + 0.5) * h_in / H1 - 0.5 = ((2H + 1) * h_in - H1) / (2 * H1)
            num = jnp.maximum((2 * H + 1) * h_in - H1, 0)
            h0 = num // (2 * H1)
            l1 = (num - h0 * (2 * H1)).astype(jnp.float32) * (1.0 / (2 * H1))
            l0 = 1.0 - l1
            h1 = jnp.minimum(h0 + 1, h_in - 1)
            r0 = z_ref[0, h0].astype(jnp.float32)     # (W1, E)  2-tap H interpolation
            r1 = z_ref[0, h1].astype(jnp.float32)
            acc = acc + l0 * r0 + l1 * r1
        logit = jnp.maximum(acc + bias, 0.0)          # folded BN + ReLU
        logit_ref[0, u] = logit.astype(logit_ref.dtype)
        # TODO(synk): Dropout2d(0.1) is eval-mode identity (no channel dropout).
        p = jnp.dot(logit.astype(wp.dtype), wp, preferred_element_type=jnp.float32) + bp
        pred_ref[0, u] = p.astype(pred_ref.dtype)


def fuse_head(c1, zs, h_sizes, w1_eff, bias, pred_w, pred_b, th):
    n, H1, W1, C1 = c1.shape
    E = w1_eff.shape[1]
    K = pred_w.shape[1]
    if H1 % th != 0:
        raise ValueError(f"th={th} must divide H1={H1}")
    nj = H1 // th

    # VMEM budget: double-buffered resident branches + streamed c1 tile + outputs.
    z_isz = zs[0].dtype.itemsize
    est = (2 * (sum(h * W1 * E for h in h_sizes) * z_isz
                + th * W1 * C1 * c1.dtype.itemsize
                + th * W1 * (E + K) * 4)
           + (C1 * E + E + E * K + K) * 4)
    vmem_limit = int(min(max(32 * 1024 * 1024, est + 4 * 1024 * 1024),
                         64 * 1024 * 1024))  # keep <= v7x physical VMEM

    in_specs = [pl.BlockSpec((1, th, W1, C1), lambda b, j: (b, j, 0, 0))]
    for z in zs:  # whole per-batch resident blocks; re-DMA'd only when b changes
        in_specs.append(
            pl.BlockSpec((1, z.shape[1], W1, E), lambda b, j: (b, 0, 0, 0)))
    in_specs += [
        pl.BlockSpec((C1, E), lambda b, j: (0, 0)),
        pl.BlockSpec((1, E), lambda b, j: (0, 0)),
        pl.BlockSpec((E, K), lambda b, j: (0, 0)),
        pl.BlockSpec((1, K), lambda b, j: (0, 0)),
    ]
    kernel = functools.partial(_fuse_kernel, th=th, W1=W1, H1=H1,
                               h_sizes=tuple(h_sizes))
    pred, logit = pl.pallas_call(
        kernel,
        out_shape=(jax.ShapeDtypeStruct((n, H1, W1, K), jnp.float32),
                   jax.ShapeDtypeStruct((n, H1, W1, E), jnp.float32)),
        grid=(n, nj),
        in_specs=in_specs,
        out_specs=(pl.BlockSpec((1, th, W1, K), lambda b, j: (b, j, 0, 0)),
                   pl.BlockSpec((1, th, W1, E), lambda b, j: (b, j, 0, 0))),
        compiler_params=pltpu.CompilerParams(
            dimension_semantics=("parallel", "parallel"),
            vmem_limit_bytes=vmem_limit),
    )(c1, *zs, w1_eff, bias, pred_w, pred_b)
    return pred, logit


# ----------------------------------------------------------------------------
# One-time parameter folding: MLP head + fuse-conv slice + BatchNorm.
# ----------------------------------------------------------------------------
def prepare_params(params, eps=1e-5, compute_dtype=jnp.float32):
    E = params['fuse_w'].shape[1]
    s = params['bn_gamma'] * jax.lax.rsqrt(params['bn_var'] + eps)    # (1, E)
    shift = params['bn_beta'] - params['bn_mean'] * s                 # (1, E)
    fuse_w = params['fuse_w']     # (4E, E); row blocks in concat order c4,c3,c2,c1
    blocks = {'c4': fuse_w[0:E], 'c3': fuse_w[E:2 * E],
              'c2': fuse_w[2 * E:3 * E], 'c1': fuse_w[3 * E:4 * E]}
    prep = {'E': E, 'K': params['pred_w'].shape[1]}
    bias = shift
    for name in ('c4', 'c3', 'c2', 'c1'):
        w_eff = (params[name]['w'] @ blocks[name]) * s                # (Cin, E)
        prep[name] = w_eff.astype(compute_dtype)
        bias = bias + (params[name]['b'] @ blocks[name]) * s
    # Valid to add the bias after upsampling: bilinear weights sum to 1.
    prep['bias'] = bias.astype(jnp.float32)
    prep['pred_w'] = params['pred_w'].astype(compute_dtype)
    prep['pred_b'] = params['pred_b'].astype(jnp.float32)
    return prep


# ----------------------------------------------------------------------------
# SegFormerHead forward
# ----------------------------------------------------------------------------
def segformer_head_forward(feats_nhwc, prep, th=None):
    """feats_nhwc = (c1, c2, c3, c4), each NHWC.  Returns (pred, logit) NHWC."""
    c1, c2, c3, c4 = feats_nhwc
    n, H1, W1, _ = c1.shape
    cdt = prep['c1'].dtype
    if th is None:
        # ~1024 output rows per tile, capped unroll; must divide H1.
        th = _largest_divisor_leq(H1, max(1, min(16, 1024 // max(W1, 1))))

    zs, h_sizes = [], []
    for x, name in ((c2, 'c2'), (c3, 'c3'), (c4, 'c4')):
        ww = bilinear_matrix(W1, x.shape[2])               # (W1, w_i) f32
        zs.append(branch_project_upsample(x.astype(cdt), prep[name], ww))
        h_sizes.append(x.shape[1])

    return fuse_head(c1.astype(cdt), zs, h_sizes, prep['c1'], prep['bias'],
                     prep['pred_w'], prep['pred_b'], th)


# ----------------------------------------------------------------------------
# Pure-JAX reference in the original PyTorch order (MLP -> upsample -> concat ->
# fuse -> BN -> ReLU -> pred) for numerical validation of the restructuring.
# ----------------------------------------------------------------------------
def upsample_bilinear_nhwc(x, out_hw):
    n, h, w, c = x.shape
    H, W = out_hw
    if (h, w) == (H, W):
        return x
    Wh = bilinear_matrix(H, h)
    Ww = bilinear_matrix(W, w)
    y = jnp.einsum('Hh,nhwc->nHwc', Wh, x)
    y = jnp.einsum('Ww,nhwc->nhWc', Ww, y)
    return y


def segformer_head_reference(feats_nhwc, params, eps=1e-5):
    c1, c2, c3, c4 = feats_nhwc
    n, H1, W1, _ = c1.shape
    ups = []
    for x, name in ((c4, 'c4'), (c3, 'c3'), (c2, 'c2'), (c1, 'c1')):
        N, h, w, C = x.shape
        p = params[name]
        y = x.reshape(N * h * w, C) @ p['w'] + p['b']
        y = y.reshape(N, h, w, -1)
        ups.append(upsample_bilinear_nhwc(y, (H1, W1)))
    xcat = jnp.concatenate(ups, axis=-1).reshape(n * H1 * W1, -1)
    y = xcat @ params['fuse_w']
    inv = params['bn_gamma'] * jax.lax.rsqrt(params['bn_var'] + eps)
    y = (y - params['bn_mean']) * inv + params['bn_beta']
    y = jnp.maximum(y, 0.0)
    pred = y @ params['pred_w'] + params['pred_b']
    return pred.reshape(n, H1, W1, -1), y.reshape(n, H1, W1, -1)


# ----------------------------------------------------------------------------
# Deterministic parameter construction + demo run
# ----------------------------------------------------------------------------
def make_params(key, in_channels, embedding_dim, num_classes):
    params = {}
    keys = jax.random.split(key, 16)
    names = ('c1', 'c2', 'c3', 'c4')
    for i, (name, cin) in enumerate(zip(names, in_channels)):
        params[name] = {
            'w': 0.05 * jax.random.normal(keys[2 * i], (cin, embedding_dim), jnp.float32),
            'b': 0.01 * jax.random.normal(keys[2 * i + 1], (1, embedding_dim), jnp.float32),
        }
    params['fuse_w'] = 0.05 * jax.random.normal(keys[8], (4 * embedding_dim, embedding_dim), jnp.float32)
    params['bn_gamma'] = 1.0 + 0.1 * jax.random.normal(keys[9], (1, embedding_dim), jnp.float32)
    params['bn_beta'] = 0.1 * jax.random.normal(keys[10], (1, embedding_dim), jnp.float32)
    params['bn_mean'] = 0.05 * jax.random.normal(keys[11], (1, embedding_dim), jnp.float32)
    params['bn_var'] = 1.0 + 0.1 * jax.random.uniform(keys[12], (1, embedding_dim), jnp.float32)
    params['pred_w'] = 0.05 * jax.random.normal(keys[13], (embedding_dim, num_classes), jnp.float32)
    params['pred_b'] = 0.01 * jax.random.normal(keys[14], (1, num_classes), jnp.float32)
    return params


if __name__ == "__main__":
    # feature_strides=(4, 8, 16, 32), in_channels=(8, 16, 32, 64)
    in_channels = (8, 16, 32, 64)
    embedding_dim = 32
    num_classes = 8
    n = 2

    key = jax.random.PRNGKey(0)
    k_param, k1, k2, k3, k4 = jax.random.split(key, 5)
    params = make_params(k_param, in_channels, embedding_dim, num_classes)

    # NHWC feature maps (PyTorch equivalents would be the NCHW transposes).
    c1 = jax.random.normal(k1, (n, 16, 16, in_channels[0]), jnp.float32)
    c2 = jax.random.normal(k2, (n, 8, 8, in_channels[1]), jnp.float32)
    c3 = jax.random.normal(k3, (n, 4, 4, in_channels[2]), jnp.float32)
    c4 = jax.random.normal(k4, (n, 2, 2, in_channels[3]), jnp.float32)
    feats = (c1, c2, c3, c4)

    with jax.default_matmul_precision("highest"):
        prep = prepare_params(params)
        pred_ref, logit_ref = segformer_head_reference(feats, params)
        pred_ref = jax.block_until_ready(pred_ref)

    # th=4 exercises a multi-step (2 x 4) parallel grid: interior AND edge H blocks.
    pred, logit = segformer_head_forward(feats, prep, th=4)
    pred = jax.block_until_ready(pred)
    logit = jax.block_until_ready(logit)

    np.testing.assert_allclose(np.asarray(pred), np.asarray(pred_ref), rtol=5e-3, atol=5e-4)
    np.testing.assert_allclose(np.asarray(logit), np.asarray(logit_ref), rtol=5e-3, atol=5e-4)

    # bf16 streaming path (halves HBM traffic of weights / branch intermediates).
    with jax.default_matmul_precision("highest"):
        prep_bf16 = prepare_params(params, compute_dtype=jnp.bfloat16)
    pred_bf, logit_bf = segformer_head_forward(feats, prep_bf16, th=4)
    pred_bf = jax.block_until_ready(pred_bf)
    logit_bf = jax.block_until_ready(logit_bf)
    np.testing.assert_allclose(np.asarray(pred_bf), np.asarray(pred), rtol=5e-2, atol=5e-2)
    np.testing.assert_allclose(np.asarray(logit_bf), np.asarray(logit), rtol=5e-2, atol=5e-2)

    assert pred.shape == (n, 16, 16, num_classes)
    assert logit.shape == (n, 16, 16, embedding_dim)
    print("KERNEL_OK")
</pallas_src>

<mosaic_0001>
module attributes {stable_mosaic.version = 11 : i64} {
  func.func @_proj_up_kernel(%arg0: i32, %arg1: i32, %arg2: memref<1x8x8x16xf32, #tpu.memory_space<vmem>>, %arg3: memref<16x32xf32, #tpu.memory_space<vmem>>, %arg4: memref<16x8xf32, #tpu.memory_space<vmem>>, %arg5: memref<1x8x16x32xf32, #tpu.memory_space<vmem>>) attributes {dimension_semantics = [#tpu.dimension_semantics<parallel>, #tpu.dimension_semantics<parallel>], iteration_bounds = array<i64: 2, 1>, scalar_prefetch = 0 : i64, scratch_operands = 0 : i64, tpu.core_type = #tpu.core_type<tc>, window_params = [{transform_indices = @transform_0, window_bounds = array<i64: 1, 8, 8, 16>}, {pipeline_mode = #tpu.pipeline_mode<synchronous>, transform_indices = @transform_1, window_bounds = array<i64: 16, 32>}, {pipeline_mode = #tpu.pipeline_mode<synchronous>, transform_indices = @transform_2, window_bounds = array<i64: 16, 8>}, {transform_indices = @transform_3, window_bounds = array<i64: 1, 8, 16, 32>}]} {
    %c0 = arith.constant 0 : index
    %c0_0 = arith.constant 0 : index
    %0 = vector.load %arg3[%c0, %c0_0] : memref<16x32xf32, #tpu.memory_space<vmem>>, vector<16x32xf32>
    %c0_1 = arith.constant 0 : index
    %c0_2 = arith.constant 0 : index
    %1 = vector.load %arg4[%c0_1, %c0_2] : memref<16x8xf32, #tpu.memory_space<vmem>>, vector<16x8xf32>
    %c0_3 = arith.constant 0 : index
    %c0_4 = arith.constant 0 : index
    %c0_5 = arith.constant 0 : index
    %c0_6 = arith.constant 0 : index
    %2 = vector.load %arg2[%c0_3, %c0_4, %c0_5, %c0_6] : memref<1x8x8x16xf32, #tpu.memory_space<vmem>>, vector<1x1x8x16xf32>
    %3 = vector.shape_cast %2 : vector<1x1x8x16xf32> to vector<8x16xf32>
    %cst = arith.constant dense<0.000000e+00> : vector<8x32xf32>
    %4 = tpu.matmul %3, %0, %cst {dimension_numbers = #tpu.dot_dimension_numbers<[1], [0], [0], [1], [0, 0, 1, 1], [], []>} : vector<8x16xf32>, vector<16x32xf32>, vector<8x32xf32> -> vector<8x32xf32>
    %cst_7 = arith.constant dense<0.000000e+00> : vector<16x32xf32>
    %5 = tpu.matmul %1, %4, %cst_7 {dimension_numbers = #tpu.dot_dimension_numbers<[1], [0], [0], [1], [0, 0, 1, 1], [], []>} : vector<16x8xf32>, vector<8x32xf32>, vector<16x32xf32> -> vector<16x32xf32>
    %c0_8 = arith.constant 0 : index
    %c0_9 = arith.constant 0 : index
    %c0_10 = arith.constant 0 : index
    %c0_11 = arith.constant 0 : index
    %6 = vector.load %arg5[%c0_8, %c0_9, %c0_10, %c0_11] : memref<1x8x16x32xf32, #tpu.memory_space<vmem>>, vector<1x1x16x32xf32>
    %7 = vector.shape_cast %6 : vector<1x1x16x32xf32> to vector<16x32xf32>
    %8 = vector.shape_cast %5 : vector<16x32xf32> to vector<1x1x16x32xf32>
    tpu.vector_store %arg5[%c0_8, %c0_9, %c0_10, %c0_11], %8 {strides = array<i32>} : memref<1x8x16x32xf32, #tpu.memory_space<vmem>>, vector<1x1x16x32xf32>,
    %c0_12 = arith.constant 0 : index
    %c1 = arith.constant 1 : index
    %c0_13 = arith.constant 0 : index
    %c0_14 = arith.constant 0 : index
    %9 = vector.load %arg2[%c0_12, %c1, %c0_13, %c0_14] : memref<1x8x8x16xf32, #tpu.memory_space<vmem>>, vector<1x1x8x16xf32>
    %10 = vector.shape_cast %9 : vector<1x1x8x16xf32> to vector<8x16xf32>
    %cst_15 = arith.constant dense<0.000000e+00> : vector<8x32xf32>
    %11 = tpu.matmul %10, %0, %cst_15 {dimension_numbers = #tpu.dot_dimension_numbers<[1], [0], [0], [1], [0, 0, 1, 1], [], []>} : vector<8x16xf32>, vector<16x32xf32>, vector<8x32xf32> -> vector<8x32xf32>
    %cst_16 = arith.constant dense<0.000000e+00> : vector<16x32xf32>
    %12 = tpu.matmul %1, %11, %cst_16 {dimension_numbers = #tpu.dot_dimension_numbers<[1], [0], [0], [1], [0, 0, 1, 1], [], []>} : vector<16x8xf32>, vector<8x32xf32>, vector<16x32xf32> -> vector<16x32xf32>
    %c0_17 = arith.constant 0 : index
    %c1_18 = arith.constant 1 : index
    %c0_19 = arith.constant 0 : index
    %c0_20 = arith.constant 0 : index
    %13 = vector.load %arg5[%c0_17, %c1_18, %c0_19, %c0_20] : memref<1x8x16x32xf32, #tpu.memory_space<vmem>>, vector<1x1x16x32xf32>
    %14 = vector.shape_cast %13 : vector<1x1x16x32xf32> to vector<16x32xf32>
    %15 = vector.shape_cast %12 : vector<16x32xf32> to vector<1x1x16x32xf32>
    tpu.vector_store %arg5[%c0_17, %c1_18, %c0_19, %c0_20], %15 {strides = array<i32>} : memref<1x8x16x32xf32, #tpu.memory_space<vmem>>, vector<1x1x16x32xf32>,
    %c0_21 = arith.constant 0 : index
    %c2 = arith.constant 2 : index
    %c0_22 = arith.constant 0 : index
    %c0_23 = arith.constant 0 : index
    %16 = vector.load %arg2[%c0_21, %c2, %c0_22, %c0_23] : memref<1x8x8x16xf32, #tpu.memory_space<vmem>>, vector<1x1x8x16xf32>
    %17 = vector.shape_cast %16 : vector<1x1x8x16xf32> to vector<8x16xf32>
    %cst_24 = arith.constant dense<0.000000e+00> : vector<8x32xf32>
    %18 = tpu.matmul %17, %0, %cst_24 {dimension_numbers = #tpu.dot_dimension_numbers<[1], [0], [0], [1], [0, 0, 1, 1], [], []>} : vector<8x16xf32>, vector<16x32xf32>, vector<8x32xf32> -> vector<8x32xf32>
    %cst_25 = arith.constant dense<0.000000e+00> : vector<16x32xf32>
    %19 = tpu.matmul %1, %18, %cst_25 {dimension_numbers = #tpu.dot_dimension_numbers<[1], [0], [0], [1], [0, 0, 1, 1], [], []>} : vector<16x8xf32>, vector<8x32xf32>, vector<16x32xf32> -> vector<16x32xf32>
    %c0_26 = arith.constant 0 : index
    %c2_27 = arith.constant 2 : index
    %c0_28 = arith.constant 0 : index
    %c0_29 = arith.constant 0 : index
    %20 = vector.load %arg5[%c0_26, %c2_27, %c0_28, %c0_29] : memref<1x8x16x32xf32, #tpu.memory_space<vmem>>, vector<1x1x16x32xf32>
    %21 = vector.shape_cast %20 : vector<1x1x16x32xf32> to vector<16x32xf32>
    %22 = vector.shape_cast %19 : vector<16x32xf32> to vector<1x1x16x32xf32>
    tpu.vector_store %arg5[%c0_26, %c2_27, %c0_28, %c0_29], %22 {strides = array<i32>} : memref<1x8x16x32xf32, #tpu.memory_space<vmem>>, vector<1x1x16x32xf32>,
    %c0_30 = arith.constant 0 : index
    %c3 = arith.constant 3 : index
    %c0_31 = arith.constant 0 : index
    %c0_32 = arith.constant 0 : index
    %23 = vector.load %arg2[%c0_30, %c3, %c0_31, %c0_32] : memref<1x8x8x16xf32, #tpu.memory_space<vmem>>, vector<1x1x8x16xf32>
    %24 = vector.shape_cast %23 : vector<1x1x8x16xf32> to vector<8x16xf32>
    %cst_33 = arith.constant dense<0.000000e+00> : vector<8x32xf32>
    %25 = tpu.matmul %24, %0, %cst_33 {dimension_numbers = #tpu.dot_dimension_numbers<[1], [0], [0], [1], [0, 0, 1, 1], [], []>} : vector<8x16xf32>, vector<16x32xf32>, vector<8x32xf32> -> vector<8x32xf32>
    %cst_34 = arith.constant dense<0.000000e+00> : vector<16x32xf32>
    %26 = tpu.matmul %1, %25, %cst_34 {dimension_numbers = #tpu.dot_dimension_numbers<[1], [0], [0], [1], [0, 0, 1, 1], [], []>} : vector<16x8xf32>, vector<8x32xf32>, vector<16x32xf32> -> vector<16x32xf32>
    %c0_35 = arith.constant 0 : index
    %c3_36 = arith.constant 3 : index
    %c0_37 = arith.constant 0 : index
    %c0_38 = arith.constant 0 : index
    %27 = vector.load %arg5[%c0_35, %c3_36, %c0_37, %c0_38] : memref<1x8x16x32xf32, #tpu.memory_space<vmem>>, vector<1x1x16x32xf32>
    %28 = vector.shape_cast %27 : vector<1x1x16x32xf32> to vector<16x32xf32>
    %29 = vector.shape_cast %26 : vector<16x32xf32> to vector<1x1x16x32xf32>
    tpu.vector_store %arg5[%c0_35, %c3_36, %c0_37, %c0_38], %29 {strides = array<i32>} : memref<1x8x16x32xf32, #tpu.memory_space<vmem>>, vector<1x1x16x32xf32>,
    %c0_39 = arith.constant 0 : index
    %c4 = arith.constant 4 : index
    %c0_40 = arith.constant 0 : index
    %c0_41 = arith.constant 0 : index
    %30 = vector.load %arg2[%c0_39, %c4, %c0_40, %c0_41] : memref<1x8x8x16xf32, #tpu.memory_space<vmem>>, vector<1x1x8x16xf32>
    %31 = vector.shape_cast %30 : vector<1x1x8x16xf32> to vector<8x16xf32>
    %cst_42 = arith.constant dense<0.000000e+00> : vector<8x32xf32>
    %32 = tpu.matmul %31, %0, %cst_42 {dimension_numbers = #tpu.dot_dimension_numbers<[1], [0], [0], [1], [0, 0, 1, 1], [], []>} : vector<8x16xf32>, vector<16x32xf32>, vector<8x32xf32> -> vector<8x32xf32>
    %cst_43 = arith.constant dense<0.000000e+00> : vector<16x32xf32>
    %33 = tpu.matmul %1, %32, %cst_43 {dimension_numbers = #tpu.dot_dimension_numbers<[1], [0], [0], [1], [0, 0, 1, 1], [], []>} : vector<16x8xf32>, vector<8x32xf32>, vector<16x32xf32> -> vector<16x32xf32>
    %c0_44 = arith.constant 0 : index
    %c4_45 = arith.constant 4 : index
    %c0_46 = arith.constant 0 : index
    %c0_47 = arith.constant 0 : index
    %34 = vector.load %arg5[%c0_44, %c4_45, %c0_46, %c0_47] : memref<1x8x16x32xf32, #tpu.memory_space<vmem>>, vector<1x1x16x32xf32>
    %35 = vector.shape_cast %34 : vector<1x1x16x32xf32> to vector<16x32xf32>
    %36 = vector.shape_cast %33 : vector<16x32xf32> to vector<1x1x16x32xf32>
    tpu.vector_store %arg5[%c0_44, %c4_45, %c0_46, %c0_47], %36 {strides = array<i32>} : memref<1x8x16x32xf32, #tpu.memory_space<vmem>>, vector<1x1x16x32xf32>,
    %c0_48 = arith.constant 0 : index
    %c5 = arith.constant 5 : index
    %c0_49 = arith.constant 0 : index
    %c0_50 = arith.constant 0 : index
    %37 = vector.load %arg2[%c0_48, %c5, %c0_49, %c0_50] : memref<1x8x8x16xf32, #tpu.memory_space<vmem>>, vector<1x1x8x16xf32>
    %38 = vector.shape_cast %37 : vector<1x1x8x16xf32> to vector<8x16xf32>
    %cst_51 = arith.constant dense<0.000000e+00> : vector<8x32xf32>
    %39 = tpu.matmul %38, %0, %cst_51 {dimension_numbers = #tpu.dot_dimension_numbers<[1], [0], [0], [1], [0, 0, 1, 1], [], []>} : vector<8x16xf32>, vector<16x32xf32>, vector<8x32xf32> -> vector<8x32xf32>
    %cst_52 = arith.constant dense<0.000000e+00> : vector<16x32xf32>
    %40 = tpu.matmul %1, %39, %cst_52 {dimension_numbers = #tpu.dot_dimension_numbers<[1], [0], [0], [1], [0, 0, 1, 1], [], []>} : vector<16x8xf32>, vector<8x32xf32>, vector<16x32xf32> -> vector<16x32xf32>
    %c0_53 = arith.constant 0 : index
    %c5_54 = arith.constant 5 : index
    %c0_55 = arith.constant 0 : index
    %c0_56 = arith.constant 0 : index
    %41 = vector.load %arg5[%c0_53, %c5_54, %c0_55, %c0_56] : memref<1x8x16x32xf32, #tpu.memory_space<vmem>>, vector<1x1x16x32xf32>
    %42 = vector.shape_cast %41 : vector<1x1x16x32xf32> to vector<16x32xf32>
    %43 = vector.shape_cast %40 : vector<16x32xf32> to vector<1x1x16x32xf32>
    tpu.vector_store %arg5[%c0_53, %c5_54, %c0_55, %c0_56], %43 {strides = array<i32>} : memref<1x8x16x32xf32, #tpu.memory_space<vmem>>, vector<1x1x16x32xf32>,
    %c0_57 = arith.constant 0 : index
    %c6 = arith.constant 6 : index
    %c0_58 = arith.constant 0 : index
    %c0_59 = arith.constant 0 : index
    %44 = vector.load %arg2[%c0_57, %c6, %c0_58, %c0_59] : memref<1x8x8x16xf32, #tpu.memory_space<vmem>>, vector<1x1x8x16xf32>
    %45 = vector.shape_cast %44 : vector<1x1x8x16xf32> to vector<8x16xf32>
    %cst_60 = arith.constant dense<0.000000e+00> : vector<8x32xf32>
    %46 = tpu.matmul %45, %0, %cst_60 {dimension_numbers = #tpu.dot_dimension_numbers<[1], [0], [0], [1], [0, 0, 1, 1], [], []>} : vector<8x16xf32>, vector<16x32xf32>, vector<8x32xf32> -> vector<8x32xf32>
    %cst_61 = arith.constant dense<0.000000e+00> : vector<16x32xf32>
    %47 = tpu.matmul %1, %46, %cst_61 {dimension_numbers = #tpu.dot_dimension_numbers<[1], [0], [0], [1], [0, 0, 1, 1], [], []>} : vector<16x8xf32>, vector<8x32xf32>, vector<16x32xf32> -> vector<16x32xf32>
    %c0_62 = arith.constant 0 : index
    %c6_63 = arith.constant 6 : index
    %c0_64 = arith.constant 0 : index
    %c0_65 = arith.constant 0 : index
    %48 = vector.load %arg5[%c0_62, %c6_63, %c0_64, %c0_65] : memref<1x8x16x32xf32, #tpu.memory_space<vmem>>, vector<1x1x16x32xf32>
    %49 = vector.shape_cast %48 : vector<1x1x16x32xf32> to vector<16x32xf32>
    %50 = vector.shape_cast %47 : vector<16x32xf32> to vector<1x1x16x32xf32>
    tpu.vector_store %arg5[%c0_62, %c6_63, %c0_64, %c0_65], %50 {strides = array<i32>} : memref<1x8x16x32xf32, #tpu.memory_space<vmem>>, vector<1x1x16x32xf32>,
    %c0_66 = arith.constant 0 : index
    %c7 = arith.constant 7 : index
    %c0_67 = arith.constant 0 : index
    %c0_68 = arith.constant 0 : index
    %51 = vector.load %arg2[%c0_66, %c7, %c0_67, %c0_68] : memref<1x8x8x16xf32, #tpu.memory_space<vmem>>, vector<1x1x8x16xf32>
    %52 = vector.shape_cast %51 : vector<1x1x8x16xf32> to vector<8x16xf32>
    %cst_69 = arith.constant dense<0.000000e+00> : vector<8x32xf32>
    %53 = tpu.matmul %52, %0, %cst_69 {dimension_numbers = #tpu.dot_dimension_numbers<[1], [0], [0], [1], [0, 0, 1, 1], [], []>} : vector<8x16xf32>, vector<16x32xf32>, vector<8x32xf32> -> vector<8x32xf32>
    %cst_70 = arith.constant dense<0.000000e+00> : vector<16x32xf32>
    %54 = tpu.matmul %1, %53, %cst_70 {dimension_numbers = #tpu.dot_dimension_numbers<[1], [0], [0], [1], [0, 0, 1, 1], [], []>} : vector<16x8xf32>, vector<8x32xf32>, vector<16x32xf32> -> vector<16x32xf32>
    %c0_71 = arith.constant 0 : index
    %c7_72 = arith.constant 7 : index
    %c0_73 = arith.constant 0 : index
    %c0_74 = arith.constant 0 : index
    %55 = vector.load %arg5[%c0_71, %c7_72, %c0_73, %c0_74] : memref<1x8x16x32xf32, #tpu.memory_space<vmem>>, vector<1x1x16x32xf32>
    %56 = vector.shape_cast %55 : vector<1x1x16x32xf32> to vector<16x32xf32>
    %57 = vector.shape_cast %54 : vector<16x32xf32> to vector<1x1x16x32xf32>
    tpu.vector_store %arg5[%c0_71, %c7_72, %c0_73, %c0_74], %57 {strides = array<i32>} : memref<1x8x16x32xf32, #tpu.memory_space<vmem>>, vector<1x1x16x32xf32>,
    return
  }
  func.func @transform_0(%arg0: i32, %arg1: i32) -> (i32, i32, i32, i32) {
    %c0_i32 = arith.constant 0 : i32
    %c0_i32_0 = arith.constant 0 : i32
    %c0_i32_1 = arith.constant 0 : i32
    return %arg0, %arg1, %c0_i32, %c0_i32_0 : i32, i32, i32, i32
  }
  func.func @transform_1(%arg0: i32, %arg1: i32) -> (i32, i32) {
    %c0_i32 = arith.constant 0 : i32
    %c0_i32_0 = arith.constant 0 : i32
    %c0_i32_1 = arith.constant 0 : i32
    return %c0_i32, %c0_i32_0 : i32, i32
  }
  func.func @transform_2(%arg0: i32, %arg1: i32) -> (i32, i32) {
    %c0_i32 = arith.constant 0 : i32
    %c0_i32_0 = arith.constant 0 : i32
    %c0_i32_1 = arith.constant 0 : i32
    return %c0_i32, %c0_i32_0 : i32, i32
  }
  func.func @transform_3(%arg0: i32, %arg1: i32) -> (i32, i32, i32, i32) {
    %c0_i32 = arith.constant 0 : i32
    %c0_i32_0 = arith.constant 0 : i32
    %c0_i32_1 = arith.constant 0 : i32
    return %arg0, %arg1, %c0_i32, %c0_i32_0 : i32, i32, i32, i32
  }
}

</mosaic_0001>

<llo_original>
// kernel: tpu_custom_call.1
$region0: #{tpu_custom_call.1}
  #allocation0 [shape = 'u32[]', space=smem, size = 0x4, offset = 0x4, fixed_abs, tag = 'smem constant byte address 0x4 - core index']
  #allocation1 [shape = 'u32[144,128]{1,0:T(1,128)}', space=vmem, size = 0x12000, scoped, tag = 'internal scratch']
  %s0 = inlined_call_operand.hbm [shape: f32[2,8,8,16], index: 0, kind: input, shape index: {}]
  %s1 = inlined_call_operand.vmem [shape: f32[16,32], index: 1, kind: input, shape index: {}]
  %s2 = inlined_call_operand.vmem [shape: f32[16,8], index: 2, kind: input, shape index: {}]
  %s3 = inlined_call_operand.hbm [shape: f32[2,8,16,32], index: 3, kind: output, shape index: {}]
  %s4 = sld [smem:[#allocation0]]
  $region49: #{tpu_custom_call.1} parent=0
    _
  %s6 = ssub.s32 1, %s4
  %s7 = scalar_select 0, %s6, %s4
  $region1: #{tpu_custom_call.1} parent=0
    #allocation2 [shape = 'u8[65536]{0}', space=vmem, size = 0x10000, scoped, tag = 'input window, operand 0']
    #allocation3 [shape = 's32[2]{0}', space=sflag, size = 0x8, scoped, tag = 'scoped memory for tpu_custom_call.1']
    #allocation4 [shape = 's32[2]{0}', space=sflag, size = 0x8, scoped, tag = 'scoped memory for tpu_custom_call.1']
    #allocation5 [shape = 'u8[131072]{0}', space=vmem, size = 0x20000, scoped, tag = 'output window, operand 0']
    %8 = vsyncpa [#allocation3], 0
    %s9 = scalar_lea.sflag [#allocation3], 1
    %10 = vsyncpa %s9, 0
    %11 = vsyncpa [#allocation4], 0
    %s12 = scalar_lea.sflag [#allocation4], 1
    %13 = vsyncpa %s12, 0
    loop: start=0, step=1, limit=4
    $region2: #{tpu_custom_call.1} parent=1 // loop_pre_header
      _
    $region3: #{tpu_custom_call.1} parent=1 // loop_header
      %s15 = sphi 0, %s19
      %p16 = scmp.ge.s32.totalorder %s15, 4
      %s22 = sphi 0, %s34
      %s23 = sphi 0, %s30
      %s24 = sphi 0, %s22
      %s25 = sphi 0, %s23
      %s26 = sphi 0, %s24
      %s27 = sphi 0, %s25
      %s39 = sphi 0, %s41
      %s42 = sphi 0, %s39
      %s43 = sphi 0, %s42
      %s59 = sphi 0, %s43
      %s63 = sphi 0, %s63
      %s65 = sphi 0, %s63
      %s66 = sphi 0, %s65
      %s80 = sphi 0, %s66
      %s84 = sphi 0, %s84
      %s86 = sphi 0, %s84
      %s87 = sphi 0, %s86
      %s101 = sphi 0, %s87
      %s109 = sphi 0, %s111
      %s112 = sphi 0, %s109
      %s113 = sphi 0, %s112
      %s129 = sphi 0, %s113
    $region4: #{tpu_custom_call.1} parent=1 // loop_header_branch
      %18 = sbr.rel (%p16) target = $region8
    $region5: #{tpu_custom_call.1} parent=1 // loop_body
      %s20 = ssub.s32 %s15, 1
      %s21 = ssub.s32 %s15, 2
      %s28 = sadd.s32 1, %s23
      %p29 = scmp.ge.s32.totalorder %s28, 1
      %s30 = scalar_select %p29, 0, %s28
      %s31 = sadd.s32 1, %s22
      %s32 = scalar_select %p29, %s31, %s22
      %p33 = scmp.ge.s32.totalorder %s32, 2
      %s34 = scalar_select %p33, 0, %s32
      %s35 = ssub.s32 %s22, %s34
      %s36 = ssub.s32 %s23, %s30
      %s37 = sor.u32 %s35, %s36
      %p38 = scmp.eq.s32.totalorder %s37, 0
      %s40 = sadd.s32 %s39, 1
      %s41 = scalar_select %p38, %s39, %s40
      %p44 = pneg %p38
      %p45 = scmp.eq.s32.totalorder %s15, 1
      %p46 = por %p44, %p45
      %p47 = scmp.ne.s32.totalorder %s39, %s42
      %p48 = scmp.eq.s32.totalorder %s15, 0
      %p49 = por %p47, %p48
      %p50 = scmp.ne.s32.totalorder %s39, %s42
      %p51 = scmp.eq.s32.totalorder %s20, 1
      %p52 = por %p50, %p51
      %p53 = scmp.ne.s32.totalorder %s42, %s43
      %p54 = scmp.eq.s32.totalorder %s20, 0
      %p55 = por %p53, %p54
      %p56 = scmp.ne.s32.totalorder %s42, %s43
      %p57 = scmp.eq.s32.totalorder %s21, 1
      %p58 = por %p56, %p57
      %p60 = scmp.ne.s32.totalorder %s43, %s59
      %p61 = scmp.eq.s32.totalorder %s21, 0
      %p62 = por %p60, %p61
      %s64 = sadd.s32 %s63, 1
      %p67 = scmp.eq.s32.totalorder %s15, 1
      %p68 = scmp.ne.s32.totalorder %s63, %s65
      %p69 = scmp.eq.s32.totalorder %s15, 0
      %p70 = por %p68, %p69
      %p71 = scmp.ne.s32.totalorder %s63, %s65
      %p72 = scmp.eq.s32.totalorder %s20, 1
      %p73 = por %p71, %p72
      %p74 = scmp.ne.s32.totalorder %s65, %s66
      %p75 = scmp.eq.s32.totalorder %s20, 0
      %p76 = por %p74, %p75
      %p77 = scmp.ne.s32.totalorder %s65, %s66
      %p78 = scmp.eq.s32.totalorder %s21, 1
      %p79 = por %p77, %p78
      %p81 = scmp.ne.s32.totalorder %s66, %s80
      %p82 = scmp.eq.s32.totalorder %s21, 0
      %p83 = por %p81, %p82
      %s85 = sadd.s32 %s84, 1
      %p88 = scmp.eq.s32.totalorder %s15, 1
      %p89 = scmp.ne.s32.totalorder %s84, %s86
      %p90 = scmp.eq.s32.totalorder %s15, 0
      %p91 = por %p89, %p90
      %p92 = scmp.ne.s32.totalorder %s84, %s86
      %p93 = scmp.eq.s32.totalorder %s20, 1
      %p94 = por %p92, %p93
      %p95 = scmp.ne.s32.totalorder %s86, %s87
      %p96 = scmp.eq.s32.totalorder %s20, 0
      %p97 = por %p95, %p96
      %p98 = scmp.ne.s32.totalorder %s86, %s87
      %p99 = scmp.eq.s32.totalorder %s21, 1
      %p100 = por %p98, %p99
      %p102 = scmp.ne.s32.totalorder %s87, %s101
      %p103 = scmp.eq.s32.totalorder %s21, 0
      %p104 = por %p102, %p103
      %s105 = ssub.s32 %s22, %s34
      %s106 = ssub.s32 %s23, %s30
      %s107 = sor.u32 %s105, %s106
      %p108 = scmp.eq.s32.totalorder %s107, 0
      %s110 = sadd.s32 %s109, 1
      %s111 = scalar_select %p108, %s109, %s110
      %p114 = pneg %p108
      %p115 = scmp.eq.s32.totalorder %s15, 1
      %p116 = por %p114, %p115
      %p117 = scmp.ne.s32.totalorder %s109, %s112
      %p118 = scmp.eq.s32.totalorder %s15, 0
      %p119 = por %p117, %p118
      %p120 = scmp.ne.s32.totalorder %s109, %s112
      %p121 = scmp.eq.s32.totalorder %s20, 1
      %p122 = por %p120, %p121
      %p123 = scmp.ne.s32.totalorder %s112, %s113
      %p124 = scmp.eq.s32.totalorder %s20, 0
      %p125 = por %p123, %p124
      %p126 = scmp.ne.s32.totalorder %s112, %s113
      %p127 = scmp.eq.s32.totalorder %s21, 1
      %p128 = por %p126, %p127
      %p130 = scmp.ne.s32.totalorder %s113, %s129
      %p131 = scmp.eq.s32.totalorder %s21, 0
      %p132 = por %p130, %p131
      %p133 = scmp.le.s32.totalorder 1, %s15
      %p134 = scmp.lt.s32.totalorder %s15, 3
      %p135 = pnand %p133, %p134
      %p136 = pneg %p135
      // Predicated region
      $region9: #{tpu_custom_call.1} parent=5 // pred_check
        _
      $region10: #{tpu_custom_call.1} parent=5 // pred_check_branch
        %138 = sbr.rel (%p135) target = $region12
      $region11: #{tpu_custom_call.1} parent=5 // pred_region
        %s139 = ssub.s32 %s15, 1
        // Predicated region
        $region13: #{tpu_custom_call.1} parent=11 // pred_check
          %p140 = pneg %p76
        $region14: #{tpu_custom_call.1} parent=11 // pred_check_branch
          %142 = sbr.rel (%p140) target = $region16
        $region15: #{tpu_custom_call.1} parent=11 // pred_region
          _
        $region16: #{tpu_custom_call.1} parent=11 // pred_fallthru
          _
        // Predicated region
        $region17: #{tpu_custom_call.1} parent=11 // pred_check
          %p143 = pneg %p97
        $region18: #{tpu_custom_call.1} parent=11 // pred_check_branch
          %145 = sbr.rel (%p143) target = $region20
        $region19: #{tpu_custom_call.1} parent=11 // pred_region
          _
        $region20: #{tpu_custom_call.1} parent=11 // pred_fallthru
          _
      $region12: #{tpu_custom_call.1} parent=5 // pred_fallthru
        _
      %p146 = scmp.lt.s32.totalorder %s15, 2
      // Predicated region
      $region21: #{tpu_custom_call.1} parent=5 // pred_check
        %p147 = pneg %p146
      $region22: #{tpu_custom_call.1} parent=5 // pred_check_branch
        %149 = sbr.rel (%p147) target = $region24
      $region23: #{tpu_custom_call.1} parent=5 // pred_region
        // Predicated region
        $region25: #{tpu_custom_call.1} parent=23 // pred_check
          %p150 = pneg %p49
        $region26: #{tpu_custom_call.1} parent=23 // pred_check_branch
          %152 = sbr.rel (%p150) target = $region28
        $region27: #{tpu_custom_call.1} parent=23 // pred_region
          %s153 = sand.u32 %s39, 1
          %s154 = scalar_lea.sflag [#allocation3], %s153
          %s155 = sand.u32 %s39, 1
          %s156 = smul.addr %s155, 64
          %s157 = scalar_lea.vmem [#allocation2], %s156
          %s158 = smul.u32 8, %s23
          %s160 = ssub.s32 1024, 1024
          %161 = vsyncadd %s154, %s160
          %s162 = smul.addr %s22, 8
          %s163 = sadd.s32 %s158, %s162
          %s164 = smul.addr %s163, 128
          %s165 = scalar_lea.hbm %s0, %s164
          %s166 = sshll.u32 %s157, 4
          %s167 = int_to_ptr.vmem [resolvable:$true] %s166
          %172 = dma.hbm_to_vmem [thread:$0]  %s165, 1024, %s167, %s154, 128, 128, 8
        $region28: #{tpu_custom_call.1} parent=23 // pred_fallthru
          _
      $region24: #{tpu_custom_call.1} parent=5 // pred_fallthru
        _
      %p173 = scmp.le.s32.totalorder 1, %s15
      %p174 = scmp.lt.s32.totalorder %s15, 3
      %p175 = pnand %p173, %p174
      %p176 = pneg %p175
      // Predicated region
      $region29: #{tpu_custom_call.1} parent=5 // pred_check
        _
      $region30: #{tpu_custom_call.1} parent=5 // pred_check_branch
        %178 = sbr.rel (%p175) target = $region32
      $region31: #{tpu_custom_call.1} parent=5 // pred_region
        %s179 = ssub.s32 %s15, 1
        %s180 = sand.u32 %s42, 1
        %s181 = scalar_lea.sflag [#allocation3], %s180
        %s182 = sand.u32 %s42, 1
        %s183 = smul.addr %s182, 64
        %s184 = scalar_lea.vmem [#allocation2], %s183
        // Predicated region
        $region33: #{tpu_custom_call.1} parent=31 // pred_check
          %p185 = pneg %p55
        $region34: #{tpu_custom_call.1} parent=31 // pred_check_branch
          %187 = sbr.rel (%p185) target = $region36
        $region35: #{tpu_custom_call.1} parent=31 // pred_region
          %188 = dma.done %s181, 1024
        $region36: #{tpu_custom_call.1} parent=31 // pred_fallthru
          _
        %s189 = sand.u32 %s42, 1
        %s190 = scalar_lea.sflag [#allocation3], %s189
        %s191 = sand.u32 %s42, 1
        %s192 = smul.addr %s191, 64
        %s193 = scalar_lea.vmem [#allocation2], %s192
        %p194 = pneg %p55
        %p195 = pneg %p52
        %p196 = pneg %p76
        %p197 = pneg %p73
        %p198 = pneg %p97
        %p199 = pneg %p94
        %p200 = pneg %p125
        %p201 = pneg %p122
        %s202 = sand.u32 %s112, 1
        %s203 = scalar_lea.sflag [#allocation4], %s202
        %s204 = sand.u32 %s112, 1
        %s205 = smul.addr %s204, 128
        %s206 = scalar_lea.vmem [#allocation5], %s205
        %s207 = smul.u32 8, %s25
        %s208 = smul.u32 8, %s25
        %v209 = vld [vmem:[%s1] sm:$0xff]
        %v210 = vld [vmem:[%s1 + $0x8] sm:$0xff]
        %v211 = vld [vmem:[%s2] sm:$0xff]
        %v212 = vld [vmem:[%s2 + $0x8] sm:$0xff]
        %v213 = vld [vmem:[%s184] sm:$0xff]
        %vm214 = vcmask 130048
        %v216 = vsel %vm214, %v213, 0
        %218 = vmatprep.subr.mxu0 0.0
        %219 = vmatpush1.msra.mxu0 %v209
        %220 = vmatprep.subr.mxu0 0.0
        %221 = vmatpush1.msra.mxu0 %v210
        %222 = vmatprep.subr.mxu0 0.0
        %223 = vmatpush1.msra.mxu0 0.0
        %224 = vmatprep.subr.mxu0 0.0
        %225 = vmatpush1.msra.mxu0 0.0
        %226 = vmatprep.subr.mxu0 0.0
        %227 = vmatpush1.msra.mxu0 0.0
        %228 = vmatprep.subr.mxu0 0.0
        %229 = vmatpush1.msra.mxu0 0.0
        %230 = vmatprep.subr.mxu0 0.0
        %231 = vmatpush1.msra.mxu0 0.0
        %232 = vmatprep.subr.mxu0 0.0
        %233 = vmatpush1.msra.mxu0 0.0
        %234 = vmatprep.subr.mxu0 0.0
        %235 = vmatpush1.msra.mxu0 0.0
        %236 = vmatprep.subr.mxu0 0.0
        %237 = vmatpush1.msra.mxu0 0.0
        %238 = vmatprep.subr.mxu0 0.0
        %239 = vmatpush1.msra.mxu0 0.0
        %240 = vmatprep.subr.mxu0 0.0
        %241 = vmatpush1.msra.mxu0 0.0
        %242 = vmatprep.subr.mxu0 0.0
        %243 = vmatpush1.msra.mxu0 0.0
        %244 = vmatprep.subr.mxu0 0.0
        %245 = vmatpush1.msra.mxu0 0.0
        %246 = vmatprep.subr.mxu0 0.0
        %247 = vmatpush1.msra.mxu0 0.0
        %248 = vmatprep.subr.mxu0 0.0
        %249 = vmatpush1.msra.mxu0 0.0
        %250 = vmatprep.subr.mxu0 0.0
        %251 = vmatpush1.msra.mxu0 0.0
        %252 = vmatprep.subr.mxu0 0.0
        %253 = vmatpush1.msra.mxu0 0.0
        %254 = vmatprep.subr.mxu0 0.0
        %255 = vmatpush1.msra.mxu0 0.0
        %256 = vmatprep.subr.mxu0 0.0
        %257 = vmatpush1.msra.mxu0 0.0
        %258 = vmatprep.subr.mxu0 0.0
        %259 = vmatpush1.msra.mxu0 0.0
        %260 = vmatprep.subr.mxu0 0.0
        %261 = vmatpush1.msra.mxu0 0.0
        %262 = vmatprep.subr.mxu0 0.0
        %263 = vmatpush1.msra.mxu0 0.0
        %264 = vmatprep.subr.mxu0 0.0
        %265 = vmatpush1.msra.mxu0 0.0
        %266 = vmatprep.subr.mxu0 0.0
        %267 = vmatpush1.msra.mxu0 0.0
        %268 = vmatprep.subr.mxu0 0.0
        %269 = vmatpush1.msra.mxu0 0.0
        %270 = vmatprep.subr.mxu0 0.0
        %271 = vmatpush1.msra.mxu0 0.0
        %272 = vmatprep.subr.mxu0 0.0
        %273 = vmatpush1.msra.mxu0 0.0
        %274 = vmatprep.subr.mxu0 0.0
        %275 = vmatpush1.msra.mxu0 0.0
        %276 = vmatprep.subr.mxu0 0.0
        %277 = vmatpush1.msra.mxu0 0.0
        %278 = vmatprep.subr.mxu0 0.0
        %279 = vmatpush1.msra.mxu0 0.0
        %280 = vmatprep.subr.mxu0 0.0
        %281 = vmatpush1.msra.mxu0 0.0
        %282 = vmatprep.mubr.f32.mxu0 0.0
        %283 = vmatmul.mubr.f32.gmra.mrb[0].mxu0 %v216
        %v284 = vpop.f32.mrb[0].mxu0
        %v285 = vadd.f32 0.0, %v284
        %v286 = vpop.f32.mrb[0].mxu0
        %287 = vdwg.mxu0
        %vm288 = vcmask 64512
        %v290 = vsel %vm288, %v211, 0
        %v293 = vsel %vm288, %v212, 0
        %295 = vmatprep.subr.mxu0 0.0
        %296 = vmatpush1.msra.mxu0 %v285
        %297 = vmatprep.subr.mxu0 0.0
        %298 = vmatpush1.msra.mxu0 0.0
        %299 = vmatprep.subr.mxu0 0.0
        %300 = vmatpush1.msra.mxu0 0.0
        %301 = vmatprep.subr.mxu0 0.0
        %302 = vmatpush1.msra.mxu0 0.0
        %303 = vmatprep.subr.mxu0 0.0
        %304 = vmatpush1.msra.mxu0 0.0
        %305 = vmatprep.subr.mxu0 0.0
        %306 = vmatpush1.msra.mxu0 0.0
        %307 = vmatprep.subr.mxu0 0.0
        %308 = vmatpush1.msra.mxu0 0.0
        %309 = vmatprep.subr.mxu0 0.0
        %310 = vmatpush1.msra.mxu0 0.0
        %311 = vmatprep.subr.mxu0 0.0
        %312 = vmatpush1.msra.mxu0 0.0
        %313 = vmatprep.subr.mxu0 0.0
        %314 = vmatpush1.msra.mxu0 0.0
        %315 = vmatprep.subr.mxu0 0.0
        %316 = vmatpush1.msra.mxu0 0.0
        %317 = vmatprep.subr.mxu0 0.0
        %318 = vmatpush1.msra.mxu0 0.0
        %319 = vmatprep.subr.mxu0 0.0
        %320 = vmatpush1.msra.mxu0 0.0
        %321 = vmatprep.subr.mxu0 0.0
        %322 = vmatpush1.msra.mxu0 0.0
        %323 = vmatprep.subr.mxu0 0.0
        %324 = vmatpush1.msra.mxu0 0.0
        %325 = vmatprep.subr.mxu0 0.0
        %326 = vmatpush1.msra.mxu0 0.0
        %327 = vmatprep.subr.mxu0 0.0
        %328 = vmatpush1.msra.mxu0 0.0
        %329 = vmatprep.subr.mxu0 0.0
        %330 = vmatpush1.msra.mxu0 0.0
        %331 = vmatprep.subr.mxu0 0.0
        %332 = vmatpush1.msra.mxu0 0.0
        %333 = vmatprep.subr.mxu0 0.0
        %334 = vmatpush1.msra.mxu0 0.0
        %335 = vmatprep.subr.mxu0 0.0
        %336 = vmatpush1.msra.mxu0 0.0
        %337 = vmatprep.subr.mxu0 0.0
        %338 = vmatpush1.msra.mxu0 0.0
        %339 = vmatprep.subr.mxu0 0.0
        %340 = vmatpush1.msra.mxu0 0.0
        %341 = vmatprep.subr.mxu0 0.0
        %342 = vmatpush1.msra.mxu0 0.0
        %343 = vmatprep.subr.mxu0 0.0
        %344 = vmatpush1.msra.mxu0 0.0
        %345 = vmatprep.subr.mxu0 0.0
        %346 = vmatpush1.msra.mxu0 0.0
        %347 = vmatprep.subr.mxu0 0.0
        %348 = vmatpush1.msra.mxu0 0.0
        %349 = vmatprep.subr.mxu0 0.0
        %350 = vmatpush1.msra.mxu0 0.0
        %351 = vmatprep.subr.mxu0 0.0
        %352 = vmatpush1.msra.mxu0 0.0
        %353 = vmatprep.subr.mxu0 0.0
        %354 = vmatpush1.msra.mxu0 0.0
        %355 = vmatprep.subr.mxu0 0.0
        %356 = vmatpush1.msra.mxu0 0.0
        %357 = vmatprep.subr.mxu0 0.0
        %358 = vmatpush1.msra.mxu0 0.0
        %359 = vmatprep.mubr.f32.mxu0 0.0
        %360 = vmatmul.mubr.f32.gmra.mrb[0].mxu0 %v290
        %v361 = vpop.f32.mrb[0].mxu0
        %v362 = vadd.f32 0.0, %v361
        %v363 = vpop.f32.mrb[0].mxu0
        %364 = vmatprep.mubr.f32.mxu0 0.0
        %365 = vmatmul.mubr.f32.gmra.mrb[0].mxu0 %v293
        %v366 = vpop.f32.mrb[0].mxu0
        %v367 = vadd.f32 0.0, %v366
        %v368 = vpop.f32.mrb[0].mxu0
        %369 = vdwg.mxu0
        %vm370 = vcmask 261120
        %371 = vst.msk [vmem:[%s206] sm:$0xff] %vm370, %v362
        %372 = vst.msk [vmem:[%s206 + $0x8] sm:$0xff] %vm370, %v367
        %s373 = scalar_lea.vmem %s184, 8 [#allocation2]
        %v374 = vld [vmem:[%s373] sm:$0xff]
        %v376 = vsel %vm214, %v374, 0
        %378 = vmatprep.subr.mxu0 0.0
        %379 = vmatpush1.msra.mxu0 %v209
        %380 = vmatprep.subr.mxu0 0.0
        %381 = vmatpush1.msra.mxu0 %v210
        %382 = vmatprep.subr.mxu0 0.0
        %383 = vmatpush1.msra.mxu0 0.0
        %384 = vmatprep.subr.mxu0 0.0
        %385 = vmatpush1.msra.mxu0 0.0
        %386 = vmatprep.subr.mxu0 0.0
        %387 = vmatpush1.msra.mxu0 0.0
        %388 = vmatprep.subr.mxu0 0.0
        %389 = vmatpush1.msra.mxu0 0.0
        %390 = vmatprep.subr.mxu0 0.0
        %391 = vmatpush1.msra.mxu0 0.0
        %392 = vmatprep.subr.mxu0 0.0
        %393 = vmatpush1.msra.mxu0 0.0
        %394 = vmatprep.subr.mxu0 0.0
        %395 = vmatpush1.msra.mxu0 0.0
        %396 = vmatprep.subr.mxu0 0.0
        %397 = vmatpush1.msra.mxu0 0.0
        %398 = vmatprep.subr.mxu0 0.0
        %399 = vmatpush1.msra.mxu0 0.0
        %400 = vmatprep.subr.mxu0 0.0
        %401 = vmatpush1.msra.mxu0 0.0
        %402 = vmatprep.subr.mxu0 0.0
        %403 = vmatpush1.msra.mxu0 0.0
        %404 = vmatprep.subr.mxu0 0.0
        %405 = vmatpush1.msra.mxu0 0.0
        %406 = vmatprep.subr.mxu0 0.0
        %407 = vmatpush1.msra.mxu0 0.0
        %408 = vmatprep.subr.mxu0 0.0
        %409 = vmatpush1.msra.mxu0 0.0
        %410 = vmatprep.subr.mxu0 0.0
        %411 = vmatpush1.msra.mxu0 0.0
        %412 = vmatprep.subr.mxu0 0.0
        %413 = vmatpush1.msra.mxu0 0.0
        %414 = vmatprep.subr.mxu0 0.0
        %415 = vmatpush1.msra.mxu0 0.0
        %416 = vmatprep.subr.mxu0 0.0
        %417 = vmatpush1.msra.mxu0 0.0
        %418 = vmatprep.subr.mxu0 0.0
        %419 = vmatpush1.msra.mxu0 0.0
        %420 = vmatprep.subr.mxu0 0.0
        %421 = vmatpush1.msra.mxu0 0.0
        %422 = vmatprep.subr.mxu0 0.0
        %423 = vmatpush1.msra.mxu0 0.0
        %424 = vmatprep.subr.mxu0 0.0
        %425 = vmatpush1.msra.mxu0 0.0
        %426 = vmatprep.subr.mxu0 0.0
        %427 = vmatpush1.msra.mxu0 0.0
        %428 = vmatprep.subr.mxu0 0.0
        %429 = vmatpush1.msra.mxu0 0.0
        %430 = vmatprep.subr.mxu0 0.0
        %431 = vmatpush1.msra.mxu0 0.0
        %432 = vmatprep.subr.mxu0 0.0
        %433 = vmatpush1.msra.mxu0 0.0
        %434 = vmatprep.subr.mxu0 0.0
        %435 = vmatpush1.msra.mxu0 0.0
        %436 = vmatprep.subr.mxu0 0.0
        %437 = vmatpush1.msra.mxu0 0.0
        %438 = vmatprep.subr.mxu0 0.0
        %439 = vmatpush1.msra.mxu0 0.0
        %440 = vmatprep.subr.mxu0 0.0
        %441 = vmatpush1.msra.mxu0 0.0
        %442 = vmatprep.mubr.f32.mxu0 0.0
        %443 = vmatmul.mubr.f32.gmra.mrb[0].mxu0 %v376
        %v444 = vpop.f32.mrb[0].mxu0
        %v445 = vadd.f32 0.0, %v444
        %v446 = vpop.f32.mrb[0].mxu0
        %447 = vdwg.mxu0
        %448 = vmatprep.subr.mxu0 0.0
        %449 = vmatpush1.msra.mxu0 %v445
        %450 = vmatprep.subr.mxu0 0.0
        %451 = vmatpush1.msra.mxu0 0.0
        %452 = vmatprep.subr.mxu0 0.0
        %453 = vmatpush1.msra.mxu0 0.0
        %454 = vmatprep.subr.mxu0 0.0
        %455 = vmatpush1.msra.mxu0 0.0
        %456 = vmatprep.subr.mxu0 0.0
        %457 = vmatpush1.msra.mxu0 0.0
        %458 = vmatprep.subr.mxu0 0.0
        %459 = vmatpush1.msra.mxu0 0.0
        %460 = vmatprep.subr.mxu0 0.0
        %461 = vmatpush1.msra.mxu0 0.0
        %462 = vmatprep.subr.mxu0 0.0
        %463 = vmatpush1.msra.mxu0 0.0
        %464 = vmatprep.subr.mxu0 0.0
        %465 = vmatpush1.msra.mxu0 0.0
        %466 = vmatprep.subr.mxu0 0.0
        %467 = vmatpush1.msra.mxu0 0.0
        %468 = vmatprep.subr.mxu0 0.0
        %469 = vmatpush1.msra.mxu0 0.0
        %470 = vmatprep.subr.mxu0 0.0
        %471 = vmatpush1.msra.mxu0 0.0
        %472 = vmatprep.subr.mxu0 0.0
        %473 = vmatpush1.msra.mxu0 0.0
        %474 = vmatprep.subr.mxu0 0.0
        %475 = vmatpush1.msra.mxu0 0.0
        %476 = vmatprep.subr.mxu0 0.0
        %477 = vmatpush1.msra.mxu0 0.0
        %478 = vmatprep.subr.mxu0 0.0
        %479 = vmatpush1.msra.mxu0 0.0
        %480 = vmatprep.subr.mxu0 0.0
        %481 = vmatpush1.msra.mxu0 0.0
        %482 = vmatprep.subr.mxu0 0.0
        %483 = vmatpush1.msra.mxu0 0.0
        %484 = vmatprep.subr.mxu0 0.0
        %485 = vmatpush1.msra.mxu0 0.0
        %486 = vmatprep.subr.mxu0 0.0
        %487 = vmatpush1.msra.mxu0 0.0
        %488 = vmatprep.subr.mxu0 0.0
        %489 = vmatpush1.msra.mxu0 0.0
        %490 = vmatprep.subr.mxu0 0.0
        %491 = vmatpush1.msra.mxu0 0.0
        %492 = vmatprep.subr.mxu0 0.0
        %493 = vmatpush1.msra.mxu0 0.0
        %494 = vmatprep.subr.mxu0 0.0
        %495 = vmatpush1.msra.mxu0 0.0
        %496 = vmatprep.subr.mxu0 0.0
        %497 = vmatpush1.msra.mxu0 0.0
        %498 = vmatprep.subr.mxu0 0.0
        %499 = vmatpush1.msra.mxu0 0.0
        %500 = vmatprep.subr.mxu0 0.0
        %501 = vmatpush1.msra.mxu0 0.0
        %502 = vmatprep.subr.mxu0 0.0
        %503 = vmatpush1.msra.mxu0 0.0
        %504 = vmatprep.subr.mxu0 0.0
        %505 = vmatpush1.msra.mxu0 0.0
        %506 = vmatprep.subr.mxu0 0.0
        %507 = vmatpush1.msra.mxu0 0.0
        %508 = vmatprep.subr.mxu0 0.0
        %509 = vmatpush1.msra.mxu0 0.0
        %510 = vmatprep.subr.mxu0 0.0
        %511 = vmatpush1.msra.mxu0 0.0
        %512 = vmatprep.mubr.f32.mxu0 0.0
        %513 = vmatmul.mubr.f32.gmra.mrb[0].mxu0 %v290
        %v514 = vpop.f32.mrb[0].mxu0
        %v515 = vadd.f32 0.0, %v514
        %v516 = vpop.f32.mrb[0].mxu0
        %517 = vmatprep.mubr.f32.mxu0 0.0
        %518 = vmatmul.mubr.f32.gmra.mrb[0].mxu0 %v293
        %v519 = vpop.f32.mrb[0].mxu0
        %v520 = vadd.f32 0.0, %v519
        %v521 = vpop.f32.mrb[0].mxu0
        %522 = vdwg.mxu0
        %s523 = scalar_lea.vmem %s206, 16 [#allocation5]
        %524 = vst.msk [vmem:[%s523] sm:$0xff] %vm370, %v515
        %525 = vst.msk [vmem:[%s523 + $0x8] sm:$0xff] %vm370, %v520
        %s526 = scalar_lea.vmem %s184, 16 [#allocation2]
        %v527 = vld [vmem:[%s526] sm:$0xff]
        %v529 = vsel %vm214, %v527, 0
        %531 = vmatprep.subr.mxu0 0.0
        %532 = vmatpush1.msra.mxu0 %v209
        %533 = vmatprep.subr.mxu0 0.0
        %534 = vmatpush1.msra.mxu0 %v210
        %535 = vmatprep.subr.mxu0 0.0
        %536 = vmatpush1.msra.mxu0 0.0
        %537 = vmatprep.subr.mxu0 0.0
        %538 = vmatpush1.msra.mxu0 0.0
        %539 = vmatprep.subr.mxu0 0.0
        %540 = vmatpush1.msra.mxu0 0.0
        %541 = vmatprep.subr.mxu0 0.0
        %542 = vmatpush1.msra.mxu0 0.0
        %543 = vmatprep.subr.mxu0 0.0
        %544 = vmatpush1.msra.mxu0 0.0
        %545 = vmatprep.subr.mxu0 0.0
        %546 = vmatpush1.msra.mxu0 0.0
        %547 = vmatprep.subr.mxu0 0.0
        %548 = vmatpush1.msra.mxu0 0.0
        %549 = vmatprep.subr.mxu0 0.0
        %550 = vmatpush1.msra.mxu0 0.0
        %551 = vmatprep.subr.mxu0 0.0
        %552 = vmatpush1.msra.mxu0 0.0
        %553 = vmatprep.subr.mxu0 0.0
        %554 = vmatpush1.msra.mxu0 0.0
        %555 = vmatprep.subr.mxu0 0.0
        %556 = vmatpush1.msra.mxu0 0.0
        %557 = vmatprep.subr.mxu0 0.0
        %558 = vmatpush1.msra.mxu0 0.0
        %559 = vmatprep.subr.mxu0 0.0
        %560 = vmatpush1.msra.mxu0 0.0
        %561 = vmatprep.subr.mxu0 0.0
        %562 = vmatpush1.msra.mxu0 0.0
        %563 = vmatprep.subr.mxu0 0.0
        %564 = vmatpush1.msra.mxu0 0.0
        %565 = vmatprep.subr.mxu0 0.0
        %566 = vmatpush1.msra.mxu0 0.0
        %567 = vmatprep.subr.mxu0 0.0
        %568 = vmatpush1.msra.mxu0 0.0
        %569 = vmatprep.subr.mxu0 0.0
        %570 = vmatpush1.msra.mxu0 0.0
        %571 = vmatprep.subr.mxu0 0.0
        %572 = vmatpush1.msra.mxu0 0.0
        %573 = vmatprep.subr.mxu0 0.0
        %574 = vmatpush1.msra.mxu0 0.0
        %575 = vmatprep.subr.mxu0 0.0
        %576 = vmatpush1.msra.mxu0 0.0
        %577 = vmatprep.subr.mxu0 0.0
        %578 = vmatpush1.msra.mxu0 0.0
        %579 = vmatprep.subr.mxu0 0.0
        %580 = vmatpush1.msra.mxu0 0.0
        %581 = vmatprep.subr.mxu0 0.0
        %582 = vmatpush1.msra.mxu0 0.0
        %583 = vmatprep.subr.mxu0 0.0
        %584 = vmatpush1.msra.mxu0 0.0
        %585 = vmatprep.subr.mxu0 0.0
        %586 = vmatpush1.msra.mxu0 0.0
        %587 = vmatprep.subr.mxu0 0.0
        %588 = vmatpush1.msra.mxu0 0.0
        %589 = vmatprep.subr.mxu0 0.0
        %590 = vmatpush1.msra.mxu0 0.0
        %591 = vmatprep.subr.mxu0 0.0
        %592 = vmatpush1.msra.mxu0 0.0
        %593 = vmatprep.subr.mxu0 0.0
        %594 = vmatpush1.msra.mxu0 0.0
        %595 = vmatprep.mubr.f32.mxu0 0.0
        %596 = vmatmul.mubr.f32.gmra.mrb[0].mxu0 %v529
        %v597 = vpop.f32.mrb[0].mxu0
        %v598 = vadd.f32 0.0, %v597
        %v599 = vpop.f32.mrb[0].mxu0
        %600 = vdwg.mxu0
        %601 = vmatprep.subr.mxu0 0.0
        %602 = vmatpush1.msra.mxu0 %v598
        %603 = vmatprep.subr.mxu0 0.0
        %604 = vmatpush1.msra.mxu0 0.0
        %605 = vmatprep.subr.mxu0 0.0
        %606 = vmatpush1.msra.mxu0 0.0
        %607 = vmatprep.subr.mxu0 0.0
        %608 = vmatpush1.msra.mxu0 0.0
        %609 = vmatprep.subr.mxu0 0.0
        %610 = vmatpush1.msra.mxu0 0.0
        %611 = vmatprep.subr.mxu0 0.0
        %612 = vmatpush1.msra.mxu0 0.0
        %613 = vmatprep.subr.mxu0 0.0
        %614 = vmatpush1.msra.mxu0 0.0
        %615 = vmatprep.subr.mxu0 0.0
        %616 = vmatpush1.msra.mxu0 0.0
        %617 = vmatprep.subr.mxu0 0.0
        %618 = vmatpush1.msra.mxu0 0.0
        %619 = vmatprep.subr.mxu0 0.0
        %620 = vmatpush1.msra.mxu0 0.0
        %621 = vmatprep.subr.mxu0 0.0
        %622 = vmatpush1.msra.mxu0 0.0
        %623 = vmatprep.subr.mxu0 0.0
        %624 = vmatpush1.msra.mxu0 0.0
        %625 = vmatprep.subr.mxu0 0.0
        %626 = vmatpush1.msra.mxu0 0.0
        %627 = vmatprep.subr.mxu0 0.0
        %628 = vmatpush1.msra.mxu0 0.0
        %629 = vmatprep.subr.mxu0 0.0
        %630 = vmatpush1.msra.mxu0 0.0
        %631 = vmatprep.subr.mxu0 0.0
        %632 = vmatpush1.msra.mxu0 0.0
        %633 = vmatprep.subr.mxu0 0.0
        %634 = vmatpush1.msra.mxu0 0.0
        %635 = vmatprep.subr.mxu0 0.0
        %636 = vmatpush1.msra.mxu0 0.0
        %637 = vmatprep.subr.mxu0 0.0
        %638 = vmatpush1.msra.mxu0 0.0
        %639 = vmatprep.subr.mxu0 0.0
        %640 = vmatpush1.msra.mxu0 0.0
        %641 = vmatprep.subr.mxu0 0.0
        %642 = vmatpush1.msra.mxu0 0.0
        %643 = vmatprep.subr.mxu0 0.0
        %644 = vmatpush1.msra.mxu0 0.0
        %645 = vmatprep.subr.mxu0 0.0
        %646 = vmatpush1.msra.mxu0 0.0
        %647 = vmatprep.subr.mxu0 0.0
        %648 = vmatpush1.msra.mxu0 0.0
        %649 = vmatprep.subr.mxu0 0.0
        %650 = vmatpush1.msra.mxu0 0.0
        %651 = vmatprep.subr.mxu0 0.0
        %652 = vmatpush1.msra.mxu0 0.0
        %653 = vmatprep.subr.mxu0 0.0
        %654 = vmatpush1.msra.mxu0 0.0
        %655 = vmatprep.subr.mxu0 0.0
        %656 = vmatpush1.msra.mxu0 0.0
        %657 = vmatprep.subr.mxu0 0.0
        %658 = vmatpush1.msra.mxu0 0.0
        %659 = vmatprep.subr.mxu0 0.0
        %660 = vmatpush1.msra.mxu0 0.0
        %661 = vmatprep.subr.mxu0 0.0
        %662 = vmatpush1.msra.mxu0 0.0
        %663 = vmatprep.subr.mxu0 0.0
        %664 = vmatpush1.msra.mxu0 0.0
        %665 = vmatprep.mubr.f32.mxu0 0.0
        %666 = vmatmul.mubr.f32.gmra.mrb[0].mxu0 %v290
        %v667 = vpop.f32.mrb[0].mxu0
        %v668 = vadd.f32 0.0, %v667
        %v669 = vpop.f32.mrb[0].mxu0
        %670 = vmatprep.mubr.f32.mxu0 0.0
        %671 = vmatmul.mubr.f32.gmra.mrb[0].mxu0 %v293
        %v672 = vpop.f32.mrb[0].mxu0
        %v673 = vadd.f32 0.0, %v672
        %v674 = vpop.f32.mrb[0].mxu0
        %675 = vdwg.mxu0
        %s676 = scalar_lea.vmem %s206, 32 [#allocation5]
        %677 = vst.msk [vmem:[%s676] sm:$0xff] %vm370, %v668
        %678 = vst.msk [vmem:[%s676 + $0x8] sm:$0xff] %vm370, %v673
        %s679 = scalar_lea.vmem %s184, 24 [#allocation2]
        %v680 = vld [vmem:[%s679] sm:$0xff]
        %v682 = vsel %vm214, %v680, 0
        %684 = vmatprep.subr.mxu0 0.0
        %685 = vmatpush1.msra.mxu0 %v209
        %686 = vmatprep.subr.mxu0 0.0
        %687 = vmatpush1.msra.mxu0 %v210
        %688 = vmatprep.subr.mxu0 0.0
        %689 = vmatpush1.msra.mxu0 0.0
        %690 = vmatprep.subr.mxu0 0.0
        %691 = vmatpush1.msra.mxu0 0.0
        %692 = vmatprep.subr.mxu0 0.0
        %693 = vmatpush1.msra.mxu0 0.0
        %694 = vmatprep.subr.mxu0 0.0
        %695 = vmatpush1.msra.mxu0 0.0
        %696 = vmatprep.subr.mxu0 0.0
        %697 = vmatpush1.msra.mxu0 0.0
        %698 = vmatprep.subr.mxu0 0.0
        %699 = vmatpush1.msra.mxu0 0.0
        %700 = vmatprep.subr.mxu0 0.0
        %701 = vmatpush1.msra.mxu0 0.0
        %702 = vmatprep.subr.mxu0 0.0
        %703 = vmatpush1.msra.mxu0 0.0
        %704 = vmatprep.subr.mxu0 0.0
        %705 = vmatpush1.msra.mxu0 0.0
        %706 = vmatprep.subr.mxu0 0.0
        %707 = vmatpush1.msra.mxu0 0.0
        %708 = vmatprep.subr.mxu0 0.0
        %709 = vmatpush1.msra.mxu0 0.0
        %710 = vmatprep.subr.mxu0 0.0
        %711 = vmatpush1.msra.mxu0 0.0
        %712 = vmatprep.subr.mxu0 0.0
        %713 = vmatpush1.msra.mxu0 0.0
        %714 = vmatprep.subr.mxu0 0.0
        %715 = vmatpush1.msra.mxu0 0.0
        %716 = vmatprep.subr.mxu0 0.0
        %717 = vmatpush1.msra.mxu0 0.0
        %718 = vmatprep.subr.mxu0 0.0
        %719 = vmatpush1.msra.mxu0 0.0
        %720 = vmatprep.subr.mxu0 0.0
        %721 = vmatpush1.msra.mxu0 0.0
        %722 = vmatprep.subr.mxu0 0.0
        %723 = vmatpush1.msra.mxu0 0.0
        %724 = vmatprep.subr.mxu0 0.0
        %725 = vmatpush1.msra.mxu0 0.0
        %726 = vmatprep.subr.mxu0 0.0
        %727 = vmatpush1.msra.mxu0 0.0
        %728 = vmatprep.subr.mxu0 0.0
        %729 = vmatpush1.msra.mxu0 0.0
        %730 = vmatprep.subr.mxu0 0.0
        %731 = vmatpush1.msra.mxu0 0.0
        %732 = vmatprep.subr.mxu0 0.0
        %733 = vmatpush1.msra.mxu0 0.0
        %734 = vmatprep.subr.mxu0 0.0
        %735 = vmatpush1.msra.mxu0 0.0
        %736 = vmatprep.subr.mxu0 0.0
        %737 = vmatpush1.msra.mxu0 0.0
        %738 = vmatprep.subr.mxu0 0.0
        %739 = vmatpush1.msra.mxu0 0.0
        %740 = vmatprep.subr.mxu0 0.0
        %741 = vmatpush1.msra.mxu0 0.0
        %742 = vmatprep.subr.mxu0 0.0
        %743 = vmatpush1.msra.mxu0 0.0
        %744 = vmatprep.subr.mxu0 0.0
        %745 = vmatpush1.msra.mxu0 0.0
        %746 = vmatprep.subr.mxu0 0.0
        %747 = vmatpush1.msra.mxu0 0.0
        %748 = vmatprep.mubr.f32.mxu0 0.0
        %749 = vmatmul.mubr.f32.gmra.mrb[0].mxu0 %v682
        %v750 = vpop.f32.mrb[0].mxu0
        %v751 = vadd.f32 0.0, %v750
        %v752 = vpop.f32.mrb[0].mxu0
        %753 = vdwg.mxu0
        %754 = vmatprep.subr.mxu0 0.0
        %755 = vmatpush1.msra.mxu0 %v751
        %756 = vmatprep.subr.mxu0 0.0
        %757 = vmatpush1.msra.mxu0 0.0
        %758 = vmatprep.subr.mxu0 0.0
        %759 = vmatpush1.msra.mxu0 0.0
        %760 = vmatprep.subr.mxu0 0.0
        %761 = vmatpush1.msra.mxu0 0.0
        %762 = vmatprep.subr.mxu0 0.0
        %763 = vmatpush1.msra.mxu0 0.0
        %764 = vmatprep.subr.mxu0 0.0
        %765 = vmatpush1.msra.mxu0 0.0
        %766 = vmatprep.subr.mxu0 0.0
        %767 = vmatpush1.msra.mxu0 0.0
        %768 = vmatprep.subr.mxu0 0.0
        %769 = vmatpush1.msra.mxu0 0.0
        %770 = vmatprep.subr.mxu0 0.0
        %771 = vmatpush1.msra.mxu0 0.0
        %772 = vmatprep.subr.mxu0 0.0
        %773 = vmatpush1.msra.mxu0 0.0
        %774 = vmatprep.subr.mxu0 0.0
        %775 = vmatpush1.msra.mxu0 0.0
        %776 = vmatprep.subr.mxu0 0.0
        %777 = vmatpush1.msra.mxu0 0.0
        %778 = vmatprep.subr.mxu0 0.0
        %779 = vmatpush1.msra.mxu0 0.0
        %780 = vmatprep.subr.mxu0 0.0
        %781 = vmatpush1.msra.mxu0 0.0
        %782 = vmatprep.subr.mxu0 0.0
        %783 = vmatpush1.msra.mxu0 0.0
        %784 = vmatprep.subr.mxu0 0.0
        %785 = vmatpush1.msra.mxu0 0.0
        %786 = vmatprep.subr.mxu0 0.0
        %787 = vmatpush1.msra.mxu0 0.0
        %788 = vmatprep.subr.mxu0 0.0
        %789 = vmatpush1.msra.mxu0 0.0
        %790 = vmatprep.subr.mxu0 0.0
        %791 = vmatpush1.msra.mxu0 0.0
        %792 = vmatprep.subr.mxu0 0.0
        %793 = vmatpush1.msra.mxu0 0.0
        %794 = vmatprep.subr.mxu0 0.0
        %795 = vmatpush1.msra.mxu0 0.0
        %796 = vmatprep.subr.mxu0 0.0
        %797 = vmatpush1.msra.mxu0 0.0
        %798 = vmatprep.subr.mxu0 0.0
        %799 = vmatpush1.msra.mxu0 0.0
        %800 = vmatprep.subr.mxu0 0.0
        %801 = vmatpush1.msra.mxu0 0.0
        %802 = vmatprep.subr.mxu0 0.0
        %803 = vmatpush1.msra.mxu0 0.0
        %804 = vmatprep.subr.mxu0 0.0
        %805 = vmatpush1.msra.mxu0 0.0
        %806 = vmatprep.subr.mxu0 0.0
        %807 = vmatpush1.msra.mxu0 0.0
        %808 = vmatprep.subr.mxu0 0.0
        %809 = vmatpush1.msra.mxu0 0.0
        %810 = vmatprep.subr.mxu0 0.0
        %811 = vmatpush1.msra.mxu0 0.0
        %812 = vmatprep.subr.mxu0 0.0
        %813 = vmatpush1.msra.mxu0 0.0
        %814 = vmatprep.subr.mxu0 0.0
        %815 = vmatpush1.msra.mxu0 0.0
        %816 = vmatprep.subr.mxu0 0.0
        %817 = vmatpush1.msra.mxu0 0.0
        %818 = vmatprep.mubr.f32.mxu0 0.0
        %819 = vmatmul.mubr.f32.gmra.mrb[0].mxu0 %v290
        %v820 = vpop.f32.mrb[0].mxu0
        %v821 = vadd.f32 0.0, %v820
        %v822 = vpop.f32.mrb[0].mxu0
        %823 = vmatprep.mubr.f32.mxu0 0.0
        %824 = vmatmul.mubr.f32.gmra.mrb[0].mxu0 %v293
        %v825 = vpop.f32.mrb[0].mxu0
        %v826 = vadd.f32 0.0, %v825
        %v827 = vpop.f32.mrb[0].mxu0
        %828 = vdwg.mxu0
        %s829 = scalar_lea.vmem %s206, 48 [#allocation5]
        %830 = vst.msk [vmem:[%s829] sm:$0xff] %vm370, %v821
        %831 = vst.msk [vmem:[%s829 + $0x8] sm:$0xff] %vm370, %v826
        %s832 = scalar_lea.vmem %s184, 32 [#allocation2]
        %v833 = vld [vmem:[%s832] sm:$0xff]
        %v835 = vsel %vm214, %v833, 0
        %837 = vmatprep.subr.mxu0 0.0
        %838 = vmatpush1.msra.mxu0 %v209
        %839 = vmatprep.subr.mxu0 0.0
        %840 = vmatpush1.msra.mxu0 %v210
        %841 = vmatprep.subr.mxu0 0.0
        %842 = vmatpush1.msra.mxu0 0.0
        %843 = vmatprep.subr.mxu0 0.0
        %844 = vmatpush1.msra.mxu0 0.0
        %845 = vmatprep.subr.mxu0 0.0
        %846 = vmatpush1.msra.mxu0 0.0
        %847 = vmatprep.subr.mxu0 0.0
        %848 = vmatpush1.msra.mxu0 0.0
        %849 = vmatprep.subr.mxu0 0.0
        %850 = vmatpush1.msra.mxu0 0.0
        %851 = vmatprep.subr.mxu0 0.0
        %852 = vmatpush1.msra.mxu0 0.0
        %853 = vmatprep.subr.mxu0 0.0
        %854 = vmatpush1.msra.mxu0 0.0
        %855 = vmatprep.subr.mxu0 0.0
        %856 = vmatpush1.msra.mxu0 0.0
        %857 = vmatprep.subr.mxu0 0.0
        %858 = vmatpush1.msra.mxu0 0.0
        %859 = vmatprep.subr.mxu0 0.0
        %860 = vmatpush1.msra.mxu0 0.0
        %861 = vmatprep.subr.mxu0 0.0
        %862 = vmatpush1.msra.mxu0 0.0
        %863 = vmatprep.subr.mxu0 0.0
        %864 = vmatpush1.msra.mxu0 0.0
        %865 = vmatprep.subr.mxu0 0.0
        %866 = vmatpush1.msra.mxu0 0.0
        %867 = vmatprep.subr.mxu0 0.0
        %868 = vmatpush1.msra.mxu0 0.0
        %869 = vmatprep.subr.mxu0 0.0
        %870 = vmatpush1.msra.mxu0 0.0
        %871 = vmatprep.subr.mxu0 0.0
        %872 = vmatpush1.msra.mxu0 0.0
        %873 = vmatprep.subr.mxu0 0.0
        %874 = vmatpush1.msra.mxu0 0.0
        %875 = vmatprep.subr.mxu0 0.0
        %876 = vmatpush1.msra.mxu0 0.0
        %877 = vmatprep.subr.mxu0 0.0
        %878 = vmatpush1.msra.mxu0 0.0
        %879 = vmatprep.subr.mxu0 0.0
        %880 = vmatpush1.msra.mxu0 0.0
        %881 = vmatprep.subr.mxu0 0.0
        %882 = vmatpush1.msra.mxu0 0.0
        %883 = vmatprep.subr.mxu0 0.0
        %884 = vmatpush1.msra.mxu0 0.0
        %885 = vmatprep.subr.mxu0 0.0
        %886 = vmatpush1.msra.mxu0 0.0
        %887 = vmatprep.subr.mxu0 0.0
        %888 = vmatpush1.msra.mxu0 0.0
        %889 = vmatprep.subr.mxu0 0.0
        %890 = vmatpush1.msra.mxu0 0.0
        %891 = vmatprep.subr.mxu0 0.0
        %892 = vmatpush1.msra.mxu0 0.0
        %893 = vmatprep.subr.mxu0 0.0
        %894 = vmatpush1.msra.mxu0 0.0
        %895 = vmatprep.subr.mxu0 0.0
        %896 = vmatpush1.msra.mxu0 0.0
        %897 = vmatprep.subr.mxu0 0.0
        %898 = vmatpush1.msra.mxu0 0.0
        %899 = vmatprep.subr.mxu0 0.0
        %900 = vmatpush1.msra.mxu0 0.0
        %901 = vmatprep.mubr.f32.mxu0 0.0
        %902 = vmatmul.mubr.f32.gmra.mrb[0].mxu0 %v835
        %v903 = vpop.f32.mrb[0].mxu0
        %v904 = vadd.f32 0.0, %v903
        %v905 = vpop.f32.mrb[0].mxu0
        %906 = vdwg.mxu0
        %907 = vmatprep.subr.mxu0 0.0
        %908 = vmatpush1.msra.mxu0 %v904
        %909 = vmatprep.subr.mxu0 0.0
        %910 = vmatpush1.msra.mxu0 0.0
        %911 = vmatprep.subr.mxu0 0.0
        %912 = vmatpush1.msra.mxu0 0.0
        %913 = vmatprep.subr.mxu0 0.0
        %914 = vmatpush1.msra.mxu0 0.0
        %915 = vmatprep.subr.mxu0 0.0
        %916 = vmatpush1.msra.mxu0 0.0
        %917 = vmatprep.subr.mxu0 0.0
        %918 = vmatpush1.msra.mxu0 0.0
        %919 = vmatprep.subr.mxu0 0.0
        %920 = vmatpush1.msra.mxu0 0.0
        %921 = vmatprep.subr.mxu0 0.0
        %922 = vmatpush1.msra.mxu0 0.0
        %923 = vmatprep.subr.mxu0 0.0
        %924 = vmatpush1.msra.mxu0 0.0
        %925 = vmatprep.subr.mxu0 0.0
        %926 = vmatpush1.msra.mxu0 0.0
        %927 = vmatprep.subr.mxu0 0.0
        %928 = vmatpush1.msra.mxu0 0.0
        %929 = vmatprep.subr.mxu0 0.0
        %930 = vmatpush1.msra.mxu0 0.0
        %931 = vmatprep.subr.mxu0 0.0
        %932 = vmatpush1.msra.mxu0 0.0
        %933 = vmatprep.subr.mxu0 0.0
        %934 = vmatpush1.msra.mxu0 0.0
        %935 = vmatprep.subr.mxu0 0.0
        %936 = vmatpush1.msra.mxu0 0.0
        %937 = vmatprep.subr.mxu0 0.0
        %938 = vmatpush1.msra.mxu0 0.0
        %939 = vmatprep.subr.mxu0 0.0
        %940 = vmatpush1.msra.mxu0 0.0
        %941 = vmatprep.subr.mxu0 0.0
        %942 = vmatpush1.msra.mxu0 0.0
        %943 = vmatprep.subr.mxu0 0.0
        %944 = vmatpush1.msra.mxu0 0.0
        %945 = vmatprep.subr.mxu0 0.0
        %946 = vmatpush1.msra.mxu0 0.0
        %947 = vmatprep.subr.mxu0 0.0
        %948 = vmatpush1.msra.mxu0 0.0
        %949 = vmatprep.subr.mxu0 0.0
        %950 = vmatpush1.msra.mxu0 0.0
        %951 = vmatprep.subr.mxu0 0.0
        %952 = vmatpush1.msra.mxu0 0.0
        %953 = vmatprep.subr.mxu0 0.0
        %954 = vmatpush1.msra.mxu0 0.0
        %955 = vmatprep.subr.mxu0 0.0
        %956 = vmatpush1.msra.mxu0 0.0
        %957 = vmatprep.subr.mxu0 0.0
        %958 = vmatpush1.msra.mxu0 0.0
        %959 = vmatprep.subr.mxu0 0.0
        %960 = vmatpush1.msra.mxu0 0.0
        %961 = vmatprep.subr.mxu0 0.0
        %962 = vmatpush1.msra.mxu0 0.0
        %963 = vmatprep.subr.mxu0 0.0
        %964 = vmatpush1.msra.mxu0 0.0
        %965 = vmatprep.subr.mxu0 0.0
        %966 = vmatpush1.msra.mxu0 0.0
        %967 = vmatprep.subr.mxu0 0.0
        %968 = vmatpush1.msra.mxu0 0.0
        %969 = vmatprep.subr.mxu0 0.0
        %970 = vmatpush1.msra.mxu0 0.0
        %971 = vmatprep.mubr.f32.mxu0 0.0
        %972 = vmatmul.mubr.f32.gmra.mrb[0].mxu0 %v290
        %v973 = vpop.f32.mrb[0].mxu0
        %v974 = vadd.f32 0.0, %v973
        %v975 = vpop.f32.mrb[0].mxu0
        %976 = vmatprep.mubr.f32.mxu0 0.0
        %977 = vmatmul.mubr.f32.gmra.mrb[0].mxu0 %v293
        %v978 = vpop.f32.mrb[0].mxu0
        %v979 = vadd.f32 0.0, %v978
        %v980 = vpop.f32.mrb[0].mxu0
        %981 = vdwg.mxu0
        %s982 = scalar_lea.vmem %s206, 64 [#allocation5]
        %983 = vst.msk [vmem:[%s982] sm:$0xff] %vm370, %v974
        %984 = vst.msk [vmem:[%s982 + $0x8] sm:$0xff] %vm370, %v979
        %s985 = scalar_lea.vmem %s184, 40 [#allocation2]
        %v986 = vld [vmem:[%s985] sm:$0xff]
        %v988 = vsel %vm214, %v986, 0
        %990 = vmatprep.subr.mxu0 0.0
        %991 = vmatpush1.msra.mxu0 %v209
        %992 = vmatprep.subr.mxu0 0.0
        %993 = vmatpush1.msra.mxu0 %v210
        %994 = vmatprep.subr.mxu0 0.0
        %995 = vmatpush1.msra.mxu0 0.0
        %996 = vmatprep.subr.mxu0 0.0
        %997 = vmatpush1.msra.mxu0 0.0
        %998 = vmatprep.subr.mxu0 0.0
        %999 = vmatpush1.msra.mxu0 0.0
        %1000 = vmatprep.subr.mxu0 0.0
        %1001 = vmatpush1.msra.mxu0 0.0
        %1002 = vmatprep.subr.mxu0 0.0
        %1003 = vmatpush1.msra.mxu0 0.0
        %1004 = vmatprep.subr.mxu0 0.0
        %1005 = vmatpush1.msra.mxu0 0.0
        %1006 = vmatprep.subr.mxu0 0.0
        %1007 = vmatpush1.msra.mxu0 0.0
        %1008 = vmatprep.subr.mxu0 0.0
        %1009 = vmatpush1.msra.mxu0 0.0
        %1010 = vmatprep.subr.mxu0 0.0
        %1011 = vmatpush1.msra.mxu0 0.0
        %1012 = vmatprep.subr.mxu0 0.0
        %1013 = vmatpush1.msra.mxu0 0.0
        %1014 = vmatprep.subr.mxu0 0.0
        %1015 = vmatpush1.msra.mxu0 0.0
        %1016 = vmatprep.subr.mxu0 0.0
        %1017 = vmatpush1.msra.mxu0 0.0
        %1018 = vmatprep.subr.mxu0 0.0
        %1019 = vmatpush1.msra.mxu0 0.0
        %1020 = vmatprep.subr.mxu0 0.0
        %1021 = vmatpush1.msra.mxu0 0.0
        %1022 = vmatprep.subr.mxu0 0.0
        %1023 = vmatpush1.msra.mxu0 0.0
        %1024 = vmatprep.subr.mxu0 0.0
        %1025 = vmatpush1.msra.mxu0 0.0
        %1026 = vmatprep.subr.mxu0 0.0
        %1027 = vmatpush1.msra.mxu0 0.0
        %1028 = vmatprep.subr.mxu0 0.0
        %1029 = vmatpush1.msra.mxu0 0.0
        %1030 = vmatprep.subr.mxu0 0.0
        %1031 = vmatpush1.msra.mxu0 0.0
        %1032 = vmatprep.subr.mxu0 0.0
        %1033 = vmatpush1.msra.mxu0 0.0
        %1034 = vmatprep.subr.mxu0 0.0
        %1035 = vmatpush1.msra.mxu0 0.0
        %1036 = vmatprep.subr.mxu0 0.0
        %1037 = vmatpush1.msra.mxu0 0.0
        %1038 = vmatprep.subr.mxu0 0.0
        %1039 = vmatpush1.msra.mxu0 0.0
        %1040 = vmatprep.subr.mxu0 0.0
        %1041 = vmatpush1.msra.mxu0 0.0
        %1042 = vmatprep.subr.mxu0 0.0
        %1043 = vmatpush1.msra.mxu0 0.0
        %1044 = vmatprep.subr.mxu0 0.0
        %1045 = vmatpush1.msra.mxu0 0.0
        %1046 = vmatprep.subr.mxu0 0.0
        %1047 = vmatpush1.msra.mxu0 0.0
        %1048 = vmatprep.subr.mxu0 0.0
        %1049 = vmatpush1.msra.mxu0 0.0
        %1050 = vmatprep.subr.mxu0 0.0
        %1051 = vmatpush1.msra.mxu0 0.0
        %1052 = vmatprep.subr.mxu0 0.0
        %1053 = vmatpush1.msra.mxu0 0.0
        %1054 = vmatprep.mubr.f32.mxu0 0.0
        %1055 = vmatmul.mubr.f32.gmra.mrb[0].mxu0 %v988
        %v1056 = vpop.f32.mrb[0].mxu0
        %v1057 = vadd.f32 0.0, %v1056
        %v1058 = vpop.f32.mrb[0].mxu0
        %1059 = vdwg.mxu0
        %1060 = vmatprep.subr.mxu0 0.0
        %1061 = vmatpush1.msra.mxu0 %v1057
        %1062 = vmatprep.subr.mxu0 0.0
        %1063 = vmatpush1.msra.mxu0 0.0
        %1064 = vmatprep.subr.mxu0 0.0
        %1065 = vmatpush1.msra.mxu0 0.0
        %1066 = vmatprep.subr.mxu0 0.0
        %1067 = vmatpush1.msra.mxu0 0.0
        %1068 = vmatprep.subr.mxu0 0.0
        %1069 = vmatpush1.msra.mxu0 0.0
        %1070 = vmatprep.subr.mxu0 0.0
        %1071 = vmatpush1.msra.mxu0 0.0
        %1072 = vmatprep.subr.mxu0 0.0
        %1073 = vmatpush1.msra.mxu0 0.0
        %1074 = vmatprep.subr.mxu0 0.0
        %1075 = vmatpush1.msra.mxu0 0.0
        %1076 = vmatprep.subr.mxu0 0.0
        %1077 = vmatpush1.msra.mxu0 0.0
        %1078 = vmatprep.subr.mxu0 0.0
        %1079 = vmatpush1.msra.mxu0 0.0
        %1080 = vmatprep.subr.mxu0 0.0
        %1081 = vmatpush1.msra.mxu0 0.0
        %1082 = vmatprep.subr.mxu0 0.0
        %1083 = vmatpush1.msra.mxu0 0.0
        %1084 = vmatprep.subr.mxu0 0.0
        %1085 = vmatpush1.msra.mxu0 0.0
        %1086 = vmatprep.subr.mxu0 0.0
        %1087 = vmatpush1.msra.mxu0 0.0
        %1088 = vmatprep.subr.mxu0 0.0
        %1089 = vmatpush1.msra.mxu0 0.0
        %1090 = vmatprep.subr.mxu0 0.0
        %1091 = vmatpush1.msra.mxu0 0.0
        %1092 = vmatprep.subr.mxu0 0.0
        %1093 = vmatpush1.msra.mxu0 0.0
        %1094 = vmatprep.subr.mxu0 0.0
        %1095 = vmatpush1.msra.mxu0 0.0
        %1096 = vmatprep.subr.mxu0 0.0
        %1097 = vmatpush1.msra.mxu0 0.0
        %1098 = vmatprep.subr.mxu0 0.0
        %1099 = vmatpush1.msra.mxu0 0.0
        %1100 = vmatprep.subr.mxu0 0.0
        %1101 = vmatpush1.msra.mxu0 0.0
        %1102 = vmatprep.subr.mxu0 0.0
        %1103 = vmatpush1.msra.mxu0 0.0
        %1104 = vmatprep.subr.mxu0 0.0
        %1105 = vmatpush1.msra.mxu0 0.0
        %1106 = vmatprep.subr.mxu0 0.0
        %1107 = vmatpush1.msra.mxu0 0.0
        %1108 = vmatprep.subr.mxu0 0.0
        %1109 = vmatpush1.msra.mxu0 0.0
        %1110 = vmatprep.subr.mxu0 0.0
        %1111 = vmatpush1.msra.mxu0 0.0
        %1112 = vmatprep.subr.mxu0 0.0
        %1113 = vmatpush1.msra.mxu0 0.0
        %1114 = vmatprep.subr.mxu0 0.0
        %1115 = vmatpush1.msra.mxu0 0.0
        %1116 = vmatprep.subr.mxu0 0.0
        %1117 = vmatpush1.msra.mxu0 0.0
        %1118 = vmatprep.subr.mxu0 0.0
        %1119 = vmatpush1.msra.mxu0 0.0
        %1120 = vmatprep.subr.mxu0 0.0
        %1121 = vmatpush1.msra.mxu0 0.0
        %1122 = vmatprep.subr.mxu0 0.0
        %1123 = vmatpush1.msra.mxu0 0.0
        %1124 = vmatprep.mubr.f32.mxu0 0.0
        %1125 = vmatmul.mubr.f32.gmra.mrb[0].mxu0 %v290
        %v1126 = vpop.f32.mrb[0].mxu0
        %v1127 = vadd.f32 0.0, %v1126
        %v1128 = vpop.f32.mrb[0].mxu0
        %1129 = vmatprep.mubr.f32.mxu0 0.0
        %1130 = vmatmul.mubr.f32.gmra.mrb[0].mxu0 %v293
        %v1131 = vpop.f32.mrb[0].mxu0
        %v1132 = vadd.f32 0.0, %v1131
        %v1133 = vpop.f32.mrb[0].mxu0
        %1134 = vdwg.mxu0
        %s1135 = scalar_lea.vmem %s206, 80 [#allocation5]
        %1136 = vst.msk [vmem:[%s1135] sm:$0xff] %vm370, %v1127
        %1137 = vst.msk [vmem:[%s1135 + $0x8] sm:$0xff] %vm370, %v1132
        %s1138 = scalar_lea.vmem %s184, 48 [#allocation2]
        %v1139 = vld [vmem:[%s1138] sm:$0xff]
        %v1141 = vsel %vm214, %v1139, 0
        %1143 = vmatprep.subr.mxu0 0.0
        %1144 = vmatpush1.msra.mxu0 %v209
        %1145 = vmatprep.subr.mxu0 0.0
        %1146 = vmatpush1.msra.mxu0 %v210
        %1147 = vmatprep.subr.mxu0 0.0
        %1148 = vmatpush1.msra.mxu0 0.0
        %1149 = vmatprep.subr.mxu0 0.0
        %1150 = vmatpush1.msra.mxu0 0.0
        %1151 = vmatprep.subr.mxu0 0.0
        %1152 = vmatpush1.msra.mxu0 0.0
        %1153 = vmatprep.subr.mxu0 0.0
        %1154 = vmatpush1.msra.mxu0 0.0
        %1155 = vmatprep.subr.mxu0 0.0
        %1156 = vmatpush1.msra.mxu0 0.0
        %1157 = vmatprep.subr.mxu0 0.0
        %1158 = vmatpush1.msra.mxu0 0.0
        %1159 = vmatprep.subr.mxu0 0.0
        %1160 = vmatpush1.msra.mxu0 0.0
        %1161 = vmatprep.subr.mxu0 0.0
        %1162 = vmatpush1.msra.mxu0 0.0
        %1163 = vmatprep.subr.mxu0 0.0
        %1164 = vmatpush1.msra.mxu0 0.0
        %1165 = vmatprep.subr.mxu0 0.0
        %1166 = vmatpush1.msra.mxu0 0.0
        %1167 = vmatprep.subr.mxu0 0.0
        %1168 = vmatpush1.msra.mxu0 0.0
        %1169 = vmatprep.subr.mxu0 0.0
        %1170 = vmatpush1.msra.mxu0 0.0
        %1171 = vmatprep.subr.mxu0 0.0
        %1172 = vmatpush1.msra.mxu0 0.0
        %1173 = vmatprep.subr.mxu0 0.0
        %1174 = vmatpush1.msra.mxu0 0.0
        %1175 = vmatprep.subr.mxu0 0.0
        %1176 = vmatpush1.msra.mxu0 0.0
        %1177 = vmatprep.subr.mxu0 0.0
        %1178 = vmatpush1.msra.mxu0 0.0
        %1179 = vmatprep.subr.mxu0 0.0
        %1180 = vmatpush1.msra.mxu0 0.0
        %1181 = vmatprep.subr.mxu0 0.0
        %1182 = vmatpush1.msra.mxu0 0.0
        %1183 = vmatprep.subr.mxu0 0.0
        %1184 = vmatpush1.msra.mxu0 0.0
        %1185 = vmatprep.subr.mxu0 0.0
        %1186 = vmatpush1.msra.mxu0 0.0
        %1187 = vmatprep.subr.mxu0 0.0
        %1188 = vmatpush1.msra.mxu0 0.0
        %1189 = vmatprep.subr.mxu0 0.0
        %1190 = vmatpush1.msra.mxu0 0.0
        %1191 = vmatprep.subr.mxu0 0.0
        %1192 = vmatpush1.msra.mxu0 0.0
        %1193 = vmatprep.subr.mxu0 0.0
        %1194 = vmatpush1.msra.mxu0 0.0
        %1195 = vmatprep.subr.mxu0 0.0
        %1196 = vmatpush1.msra.mxu0 0.0
        %1197 = vmatprep.subr.mxu0 0.0
        %1198 = vmatpush1.msra.mxu0 0.0
        %1199 = vmatprep.subr.mxu0 0.0
        %1200 = vmatpush1.msra.mxu0 0.0
        %1201 = vmatprep.subr.mxu0 0.0
        %1202 = vmatpush1.msra.mxu0 0.0
        %1203 = vmatprep.subr.mxu0 0.0
        %1204 = vmatpush1.msra.mxu0 0.0
        %1205 = vmatprep.subr.mxu0 0.0
        %1206 = vmatpush1.msra.mxu0 0.0
        %1207 = vmatprep.mubr.f32.mxu0 0.0
        %1208 = vmatmul.mubr.f32.gmra.mrb[0].mxu0 %v1141
        %v1209 = vpop.f32.mrb[0].mxu0
        %v1210 = vadd.f32 0.0, %v1209
        %v1211 = vpop.f32.mrb[0].mxu0
        %1212 = vdwg.mxu0
        %1213 = vmatprep.subr.mxu0 0.0
        %1214 = vmatpush1.msra.mxu0 %v1210
        %1215 = vmatprep.subr.mxu0 0.0
        %1216 = vmatpush1.msra.mxu0 0.0
        %1217 = vmatprep.subr.mxu0 0.0
        %1218 = vmatpush1.msra.mxu0 0.0
        %1219 = vmatprep.subr.mxu0 0.0
        %1220 = vmatpush1.msra.mxu0 0.0
        %1221 = vmatprep.subr.mxu0 0.0
        %1222 = vmatpush1.msra.mxu0 0.0
        %1223 = vmatprep.subr.mxu0 0.0
        %1224 = vmatpush1.msra.mxu0 0.0
        %1225 = vmatprep.subr.mxu0 0.0
        %1226 = vmatpush1.msra.mxu0 0.0
        %1227 = vmatprep.subr.mxu0 0.0
        %1228 = vmatpush1.msra.mxu0 0.0
        %1229 = vmatprep.subr.mxu0 0.0
        %1230 = vmatpush1.msra.mxu0 0.0
        %1231 = vmatprep.subr.mxu0 0.0
        %1232 = vmatpush1.msra.mxu0 0.0
        %1233 = vmatprep.subr.mxu0 0.0
        %1234 = vmatpush1.msra.mxu0 0.0
        %1235 = vmatprep.subr.mxu0 0.0
        %1236 = vmatpush1.msra.mxu0 0.0
        %1237 = vmatprep.subr.mxu0 0.0
        %1238 = vmatpush1.msra.mxu0 0.0
        %1239 = vmatprep.subr.mxu0 0.0
        %1240 = vmatpush1.msra.mxu0 0.0
        %1241 = vmatprep.subr.mxu0 0.0
        %1242 = vmatpush1.msra.mxu0 0.0
        %1243 = vmatprep.subr.mxu0 0.0
        %1244 = vmatpush1.msra.mxu0 0.0
        %1245 = vmatprep.subr.mxu0 0.0
        %1246 = vmatpush1.msra.mxu0 0.0
        %1247 = vmatprep.subr.mxu0 0.0
        %1248 = vmatpush1.msra.mxu0 0.0
        %1249 = vmatprep.subr.mxu0 0.0
        %1250 = vmatpush1.msra.mxu0 0.0
        %1251 = vmatprep.subr.mxu0 0.0
        %1252 = vmatpush1.msra.mxu0 0.0
        %1253 = vmatprep.subr.mxu0 0.0
        %1254 = vmatpush1.msra.mxu0 0.0
        %1255 = vmatprep.subr.mxu0 0.0
        %1256 = vmatpush1.msra.mxu0 0.0
        %1257 = vmatprep.subr.mxu0 0.0
        %1258 = vmatpush1.msra.mxu0 0.0
        %1259 = vmatprep.subr.mxu0 0.0
        %1260 = vmatpush1.msra.mxu0 0.0
        %1261 = vmatprep.subr.mxu0 0.0
        %1262 = vmatpush1.msra.mxu0 0.0
        %1263 = vmatprep.subr.mxu0 0.0
        %1264 = vmatpush1.msra.mxu0 0.0
        %1265 = vmatprep.subr.mxu0 0.0
        %1266 = vmatpush1.msra.mxu0 0.0
        %1267 = vmatprep.subr.mxu0 0.0
        %1268 = vmatpush1.msra.mxu0 0.0
        %1269 = vmatprep.subr.mxu0 0.0
        %1270 = vmatpush1.msra.mxu0 0.0
        %1271 = vmatprep.subr.mxu0 0.0
        %1272 = vmatpush1.msra.mxu0 0.0
        %1273 = vmatprep.subr.mxu0 0.0
        %1274 = vmatpush1.msra.mxu0 0.0
        %1275 = vmatprep.subr.mxu0 0.0
        %1276 = vmatpush1.msra.mxu0 0.0
        %1277 = vmatprep.mubr.f32.mxu0 0.0
        %1278 = vmatmul.mubr.f32.gmra.mrb[0].mxu0 %v290
        %v1279 = vpop.f32.mrb[0].mxu0
        %v1280 = vadd.f32 0.0, %v1279
        %v1281 = vpop.f32.mrb[0].mxu0
        %1282 = vmatprep.mubr.f32.mxu0 0.0
        %1283 = vmatmul.mubr.f32.gmra.mrb[0].mxu0 %v293
        %v1284 = vpop.f32.mrb[0].mxu0
        %v1285 = vadd.f32 0.0, %v1284
        %v1286 = vpop.f32.mrb[0].mxu0
        %1287 = vdwg.mxu0
        %s1288 = scalar_lea.vmem %s206, 96 [#allocation5]
        %1289 = vst.msk [vmem:[%s1288] sm:$0xff] %vm370, %v1280
        %1290 = vst.msk [vmem:[%s1288 + $0x8] sm:$0xff] %vm370, %v1285
        %s1291 = scalar_lea.vmem %s184, 56 [#allocation2]
        %v1292 = vld [vmem:[%s1291] sm:$0xff]
        %v1294 = vsel %vm214, %v1292, 0
        %1296 = vmatprep.subr.mxu0 0.0
        %1297 = vmatpush1.msra.mxu0 %v209
        %1298 = vmatprep.subr.mxu0 0.0
        %1299 = vmatpush1.msra.mxu0 %v210
        %1300 = vmatprep.subr.mxu0 0.0
        %1301 = vmatpush1.msra.mxu0 0.0
        %1302 = vmatprep.subr.mxu0 0.0
        %1303 = vmatpush1.msra.mxu0 0.0
        %1304 = vmatprep.subr.mxu0 0.0
        %1305 = vmatpush1.msra.mxu0 0.0
        %1306 = vmatprep.subr.mxu0 0.0
        %1307 = vmatpush1.msra.mxu0 0.0
        %1308 = vmatprep.subr.mxu0 0.0
        %1309 = vmatpush1.msra.mxu0 0.0
        %1310 = vmatprep.subr.mxu0 0.0
        %1311 = vmatpush1.msra.mxu0 0.0
        %1312 = vmatprep.subr.mxu0 0.0
        %1313 = vmatpush1.msra.mxu0 0.0
        %1314 = vmatprep.subr.mxu0 0.0
        %1315 = vmatpush1.msra.mxu0 0.0
        %1316 = vmatprep.subr.mxu0 0.0
        %1317 = vmatpush1.msra.mxu0 0.0
        %1318 = vmatprep.subr.mxu0 0.0
        %1319 = vmatpush1.msra.mxu0 0.0
        %1320 = vmatprep.subr.mxu0 0.0
        %1321 = vmatpush1.msra.mxu0 0.0
        %1322 = vmatprep.subr.mxu0 0.0
        %1323 = vmatpush1.msra.mxu0 0.0
        %1324 = vmatprep.subr.mxu0 0.0
        %1325 = vmatpush1.msra.mxu0 0.0
        %1326 = vmatprep.subr.mxu0 0.0
        %1327 = vmatpush1.msra.mxu0 0.0
        %1328 = vmatprep.subr.mxu0 0.0
        %1329 = vmatpush1.msra.mxu0 0.0
        %1330 = vmatprep.subr.mxu0 0.0
        %1331 = vmatpush1.msra.mxu0 0.0
        %1332 = vmatprep.subr.mxu0 0.0
        %1333 = vmatpush1.msra.mxu0 0.0
        %1334 = vmatprep.subr.mxu0 0.0
        %1335 = vmatpush1.msra.mxu0 0.0
        %1336 = vmatprep.subr.mxu0 0.0
        %1337 = vmatpush1.msra.mxu0 0.0
        %1338 = vmatprep.subr.mxu0 0.0
        %1339 = vmatpush1.msra.mxu0 0.0
        %1340 = vmatprep.subr.mxu0 0.0
        %1341 = vmatpush1.msra.mxu0 0.0
        %1342 = vmatprep.subr.mxu0 0.0
        %1343 = vmatpush1.msra.mxu0 0.0
        %1344 = vmatprep.subr.mxu0 0.0
        %1345 = vmatpush1.msra.mxu0 0.0
        %1346 = vmatprep.subr.mxu0 0.0
        %1347 = vmatpush1.msra.mxu0 0.0
        %1348 = vmatprep.subr.mxu0 0.0
        %1349 = vmatpush1.msra.mxu0 0.0
        %1350 = vmatprep.subr.mxu0 0.0
        %1351 = vmatpush1.msra.mxu0 0.0
        %1352 = vmatprep.subr.mxu0 0.0
        %1353 = vmatpush1.msra.mxu0 0.0
        %1354 = vmatprep.subr.mxu0 0.0
        %1355 = vmatpush1.msra.mxu0 0.0
        %1356 = vmatprep.subr.mxu0 0.0
        %1357 = vmatpush1.msra.mxu0 0.0
        %1358 = vmatprep.subr.mxu0 0.0
        %1359 = vmatpush1.msra.mxu0 0.0
        %1360 = vmatprep.mubr.f32.mxu0 0.0
        %1361 = vmatmul.mubr.f32.gmra.mrb[0].mxu0 %v1294
        %v1362 = vpop.f32.mrb[0].mxu0
        %v1363 = vadd.f32 0.0, %v1362
        %v1364 = vpop.f32.mrb[0].mxu0
        %1365 = vdwg.mxu0
        %1366 = vmatprep.subr.mxu0 0.0
        %1367 = vmatpush1.msra.mxu0 %v1363
        %1368 = vmatprep.subr.mxu0 0.0
        %1369 = vmatpush1.msra.mxu0 0.0
        %1370 = vmatprep.subr.mxu0 0.0
        %1371 = vmatpush1.msra.mxu0 0.0
        %1372 = vmatprep.subr.mxu0 0.0
        %1373 = vmatpush1.msra.mxu0 0.0
        %1374 = vmatprep.subr.mxu0 0.0
        %1375 = vmatpush1.msra.mxu0 0.0
        %1376 = vmatprep.subr.mxu0 0.0
        %1377 = vmatpush1.msra.mxu0 0.0
        %1378 = vmatprep.subr.mxu0 0.0
        %1379 = vmatpush1.msra.mxu0 0.0
        %1380 = vmatprep.subr.mxu0 0.0
        %1381 = vmatpush1.msra.mxu0 0.0
        %1382 = vmatprep.subr.mxu0 0.0
        %1383 = vmatpush1.msra.mxu0 0.0
        %1384 = vmatprep.subr.mxu0 0.0
        %1385 = vmatpush1.msra.mxu0 0.0
        %1386 = vmatprep.subr.mxu0 0.0
        %1387 = vmatpush1.msra.mxu0 0.0
        %1388 = vmatprep.subr.mxu0 0.0
        %1389 = vmatpush1.msra.mxu0 0.0
        %1390 = vmatprep.subr.mxu0 0.0
        %1391 = vmatpush1.msra.mxu0 0.0
        %1392 = vmatprep.subr.mxu0 0.0
        %1393 = vmatpush1.msra.mxu0 0.0
        %1394 = vmatprep.subr.mxu0 0.0
        %1395 = vmatpush1.msra.mxu0 0.0
        %1396 = vmatprep.subr.mxu0 0.0
        %1397 = vmatpush1.msra.mxu0 0.0
        %1398 = vmatprep.subr.mxu0 0.0
        %1399 = vmatpush1.msra.mxu0 0.0
        %1400 = vmatprep.subr.mxu0 0.0
        %1401 = vmatpush1.msra.mxu0 0.0
        %1402 = vmatprep.subr.mxu0 0.0
        %1403 = vmatpush1.msra.mxu0 0.0
        %1404 = vmatprep.subr.mxu0 0.0
        %1405 = vmatpush1.msra.mxu0 0.0
        %1406 = vmatprep.subr.mxu0 0.0
        %1407 = vmatpush1.msra.mxu0 0.0
        %1408 = vmatprep.subr.mxu0 0.0
        %1409 = vmatpush1.msra.mxu0 0.0
        %1410 = vmatprep.subr.mxu0 0.0
        %1411 = vmatpush1.msra.mxu0 0.0
        %1412 = vmatprep.subr.mxu0 0.0
        %1413 = vmatpush1.msra.mxu0 0.0
        %1414 = vmatprep.subr.mxu0 0.0
        %1415 = vmatpush1.msra.mxu0 0.0
        %1416 = vmatprep.subr.mxu0 0.0
        %1417 = vmatpush1.msra.mxu0 0.0
        %1418 = vmatprep.subr.mxu0 0.0
        %1419 = vmatpush1.msra.mxu0 0.0
        %1420 = vmatprep.subr.mxu0 0.0
        %1421 = vmatpush1.msra.mxu0 0.0
        %1422 = vmatprep.subr.mxu0 0.0
        %1423 = vmatpush1.msra.mxu0 0.0
        %1424 = vmatprep.subr.mxu0 0.0
        %1425 = vmatpush1.msra.mxu0 0.0
        %1426 = vmatprep.subr.mxu0 0.0
        %1427 = vmatpush1.msra.mxu0 0.0
        %1428 = vmatprep.subr.mxu0 0.0
        %1429 = vmatpush1.msra.mxu0 0.0
        %1430 = vmatprep.mubr.f32.mxu0 0.0
        %1431 = vmatmul.mubr.f32.gmra.mrb[0].mxu0 %v290
        %v1432 = vpop.f32.mrb[0].mxu0
        %v1433 = vadd.f32 0.0, %v1432
        %v1434 = vpop.f32.mrb[0].mxu0
        %1435 = vmatprep.mubr.f32.mxu0 0.0
        %1436 = vmatmul.mubr.f32.gmra.mrb[0].mxu0 %v293
        %v1437 = vpop.f32.mrb[0].mxu0
        %v1438 = vadd.f32 0.0, %v1437
        %v1439 = vpop.f32.mrb[0].mxu0
        %1440 = vdwg.mxu0
        %s1441 = scalar_lea.vmem %s206, 112 [#allocation5]
        %1442 = vst.msk [vmem:[%s1441] sm:$0xff] %vm370, %v1433
        %1443 = vst.msk [vmem:[%s1441 + $0x8] sm:$0xff] %vm370, %v1438
        %s1444 = sand.u32 %s112, 1
        %s1445 = scalar_lea.sflag [#allocation4], %s1444
        %s1446 = sand.u32 %s112, 1
        %s1447 = smul.addr %s1446, 128
        %s1448 = scalar_lea.vmem [#allocation5], %s1447
        // Predicated region
        $region37: #{tpu_custom_call.1} parent=31 // pred_check
          %p1449 = pneg %p122
        $region38: #{tpu_custom_call.1} parent=31 // pred_check_branch
          %1451 = sbr.rel (%p1449) target = $region40
        $region39: #{tpu_custom_call.1} parent=31 // pred_region
          %s1452 = smul.u32 8, %s25
          %s1454 = ssub.s32 2048, 2048
          %1455 = vsyncadd %s1445, %s1454
          %s1456 = smul.addr %s1452, 2
          %s1457 = smul.addr %s24, 16
          %s1458 = sadd.s32 %s1456, %s1457
          %s1459 = smul.addr %s1458, 128
          %s1460 = scalar_lea.hbm %s3, %s1459
          %s1461 = sshll.u32 %s1448, 4
          %s1462 = int_to_ptr.vmem [resolvable:$true] %s1461
          %1467 = dma.vmem_to_hbm [thread:$0]  %s1462, 2048, %s1460, %s1445, 128, 128, 8
        $region40: #{tpu_custom_call.1} parent=31 // pred_fallthru
          _
      $region32: #{tpu_custom_call.1} parent=5 // pred_fallthru
        _
      %p1468 = scmp.le.s32.totalorder 2, %s15
      // Predicated region
      $region41: #{tpu_custom_call.1} parent=5 // pred_check
        %p1469 = pneg %p1468
      $region42: #{tpu_custom_call.1} parent=5 // pred_check_branch
        %1471 = sbr.rel (%p1469) target = $region44
      $region43: #{tpu_custom_call.1} parent=5 // pred_region
        %s1472 = ssub.s32 %s15, 2
        // Predicated region
        $region45: #{tpu_custom_call.1} parent=43 // pred_check
          %p1473 = pneg %p128
        $region46: #{tpu_custom_call.1} parent=43 // pred_check_branch
          %1475 = sbr.rel (%p1473) target = $region48
        $region47: #{tpu_custom_call.1} parent=43 // pred_region
          %s1476 = sand.u32 %s113, 1
          %s1477 = scalar_lea.sflag [#allocation4], %s1476
          %s1478 = sand.u32 %s113, 1
          %s1479 = smul.addr %s1478, 128
          %s1480 = scalar_lea.vmem [#allocation5], %s1479
          %1481 = dma.done %s1477, 2048
        $region48: #{tpu_custom_call.1} parent=43 // pred_fallthru
          _
      $region44: #{tpu_custom_call.1} parent=5 // pred_fallthru
        _
    $region6: #{tpu_custom_call.1} parent=1 // loop_footer
      %s19 = sadd.s32 1, %s15
    $region7: #{tpu_custom_call.1} parent=1 // loop_footer_branch
      %14 = sbr.rel target = $region3
    $region8: #{tpu_custom_call.1} parent=1 // loop_exit
      _
    %1482 = vsyncpa [#allocation3], 1
    %s1483 = scalar_lea.sflag [#allocation3], 1
    %1484 = vsyncpa %s1483, 1
    %1485 = vsyncpa [#allocation4], 1
    %s1486 = scalar_lea.sflag [#allocation4], 1
    %1487 = vsyncpa %s1486, 1

</llo_original>
